<compile_context>
chip_gen: v5e
topology: v5e:2x2
jax: 0.10.0
libtpu: 0.0.40
codegen_flags: <defaults>
</compile_context>

<pallas_src>
import functools

import jax
import jax.numpy as jnp
from jax.experimental import pallas as pl
from jax.experimental.pallas import tpu as pltpu

LANE = 128
VMEM_LIMIT = 32 * 1024 * 1024  # safe scoped-VMEM cap on v5e/v6e/v7x


def _round_up(x, m):
    return ((x + m - 1) // m) * m


def _pad_to(x, target_shape):
    pads = [(0, t - s) for s, t in zip(x.shape, target_shape)]
    if all(p == (0, 0) for p in pads):
        return x
    return jnp.pad(x, pads)


def _nbytes(x):
    return int(x.size) * x.dtype.itemsize


# --------------------------------------------------------------------------- #
# RGCN part 1: fused hidden layers (E -> H -> H) + row-stacked output-layer
# messages msg_stack[r*N:(r+1)*N, :] = H2 @ W3_r  (precomputed once).
# Per-relation weights arrive batched as W_all[din, R*dout] (one wide matmul).
# --------------------------------------------------------------------------- #
def rgcn_hidden_kernel(g_ref, a_ref, w1_ref, b1_ref, w2_ref, b2_ref, w3_ref,
                       msg_ref, *, num_rels, n_pad, h_pad, e_pad):
    def layer(h16, w_all_ref, b_ref, dout):
        # one batched per-relation feature transform (lane width = R*dout)
        msg_all = jnp.dot(h16, w_all_ref[...], preferred_element_type=jnp.float32)
        msg16 = msg_all.astype(jnp.bfloat16)
        acc = jnp.zeros((n_pad, dout), jnp.float32)
        for r in range(num_rels):          # 128-aligned lane slices are free
            acc = acc + jnp.dot(a_ref[:, r * n_pad:(r + 1) * n_pad],
                                msg16[:, r * dout:(r + 1) * dout],
                                preferred_element_type=jnp.float32)
        return jnp.maximum(acc + b_ref[...], 0.0)      # bias + ReLU in f32

    h1 = layer(g_ref[...], w1_ref, b1_ref, h_pad)
    h2 = layer(h1.astype(jnp.bfloat16), w2_ref, b2_ref, h_pad)
    msg3 = jnp.dot(h2.astype(jnp.bfloat16), w3_ref[...],
                   preferred_element_type=jnp.float32).astype(jnp.bfloat16)
    for r in range(num_rels):
        msg_ref[r * n_pad:(r + 1) * n_pad, :] = msg3[:, r * e_pad:(r + 1) * e_pad]


def rgcn_hidden(g16, a_cat, w1_all, b1, w2_all, b2, w3_all, *, num_rels):
    n_pad, e_pad = g16.shape
    h_pad = b1.shape[1]
    flops = (2 * n_pad * e_pad * num_rels * h_pad
             + 2 * n_pad * h_pad * num_rels * h_pad
             + 2 * n_pad * h_pad * num_rels * e_pad
             + 2 * 2 * num_rels * n_pad * n_pad * h_pad)
    bytes_accessed = sum(_nbytes(x) for x in
                         (g16, a_cat, w1_all, b1, w2_all, b2, w3_all)) \
        + num_rels * n_pad * e_pad * 2
    kern = functools.partial(rgcn_hidden_kernel, num_rels=num_rels,
                             n_pad=n_pad, h_pad=h_pad, e_pad=e_pad)
    # TODO(synk): at real MeSH label counts A_cat no longer fits VMEM in one
    # block; stream it (memory_space=pl.ANY + emit_pipeline) and row-tile the
    # A @ msg step of each layer with a "parallel" axis.
    return pl.pallas_call(
        kern,
        out_shape=jax.ShapeDtypeStruct((num_rels * n_pad, e_pad), jnp.bfloat16),
        grid=(1,),
        in_specs=[
            pl.BlockSpec((n_pad, e_pad), lambda i: (0, 0)),
            pl.BlockSpec((n_pad, num_rels * n_pad), lambda i: (0, 0)),
            pl.BlockSpec((e_pad, num_rels * h_pad), lambda i: (0, 0)),
            pl.BlockSpec((1, h_pad), lambda i: (0, 0)),
            pl.BlockSpec((h_pad, num_rels * h_pad), lambda i: (0, 0)),
            pl.BlockSpec((1, h_pad), lambda i: (0, 0)),
            pl.BlockSpec((h_pad, num_rels * e_pad), lambda i: (0, 0)),
        ],
        out_specs=pl.BlockSpec((num_rels * n_pad, e_pad), lambda i: (0, 0)),
        compiler_params=pltpu.CompilerParams(
            dimension_semantics=("arbitrary",), vmem_limit_bytes=VMEM_LIMIT),
        cost_estimate=pl.CostEstimate(flops=int(flops), transcendentals=0,
                                      bytes_accessed=int(bytes_accessed)),
    )(g16, a_cat, w1_all, b1, w2_all, b2, w3_all)


# --------------------------------------------------------------------------- #
# RGCN part 2: output-layer aggregation + concat with g_node_feat.
#   out[i, :] = [ A_cat[i, :] @ msg_stack + b3 | g[i, :] ]
# Single full-K matmul per row tile (K = R*N), purely parallel 1-D grid.
# --------------------------------------------------------------------------- #
def rgcn_agg_kernel(a_ref, msg_ref, b_ref, g_ref, out_ref, *, e_pad):
    h3 = jnp.dot(a_ref[...], msg_ref[...],
                 preferred_element_type=jnp.float32) + b_ref[...]
    out_ref[:, :e_pad] = h3.astype(out_ref.dtype)          # no activation (output layer)
    out_ref[:, e_pad:] = g_ref[...].astype(out_ref.dtype)


def rgcn_aggregate(a_cat, msg_stack, b3, g_pad, *, tm=256):
    n_pad, rk = a_cat.shape
    e_pad = msg_stack.shape[1]
    tm = min(tm, n_pad)
    grid = (n_pad // tm,)
    flops = 2 * n_pad * rk * e_pad
    bytes_accessed = _nbytes(a_cat) + grid[0] * _nbytes(msg_stack) \
        + _nbytes(g_pad) + n_pad * 2 * e_pad * 4
    kern = functools.partial(rgcn_agg_kernel, e_pad=e_pad)
    # TODO(synk): for N that no longer fits VMEM, re-introduce a K grid axis
    # ("arbitrary") with an f32 scratch accumulator.
    return pl.pallas_call(
        kern,
        out_shape=jax.ShapeDtypeStruct((n_pad, 2 * e_pad), jnp.float32),
        grid=grid,
        in_specs=[
            pl.BlockSpec((tm, rk), lambda i: (i, 0)),
            pl.BlockSpec((rk, e_pad), lambda i: (0, 0)),
            pl.BlockSpec((1, e_pad), lambda i: (0, 0)),
            pl.BlockSpec((tm, e_pad), lambda i: (i, 0)),
        ],
        out_specs=pl.BlockSpec((tm, 2 * e_pad), lambda i: (i, 0)),
        compiler_params=pltpu.CompilerParams(
            dimension_semantics=("parallel",), vmem_limit_bytes=VMEM_LIMIT),
        cost_estimate=pl.CostEstimate(flops=int(flops), transcendentals=0,
                                      bytes_accessed=int(bytes_accessed)),
    )(a_cat, msg_stack, b3, g_pad)


# --------------------------------------------------------------------------- #
# attenCNN + final fuse.
#   grid = (batch_tiles, label_tiles).  Per step: conv GEMM (cached in VMEM
#   scratch at label tile 0), one batched scores GEMM for the whole batch tile,
#   then per-sequence softmax / content / tanh-fuse in 128-wide feature chunks.
# --------------------------------------------------------------------------- #
def atten_final_kernel(emb_ref, wconv_ref, bconv_ref, gfeat_ref, wfin_t_ref,
                       bfin_t_ref, lf_t_ref, out_ref, conv_ref, scores_ref, *,
                       b_tile, lp, lp_pad):
    j = pl.program_id(1)
    n_tile = out_ref.shape[1]
    f_chunks = lf_t_ref.shape[0] // LANE

    # Conv2d(1,nK,(ksz,E)) as one im2col GEMM, computed once per batch tile.
    @pl.when(j == 0)
    def _conv():
        acc = jnp.dot(emb_ref[...], wconv_ref[...],
                      preferred_element_type=jnp.float32)
        conv_ref[...] = jnp.maximum(acc + bconv_ref[...], 0.0).astype(conv_ref.dtype)

    # Batched scores GEMM across the whole batch tile (M = b_tile*lp_pad).
    scores = jax.lax.dot_general(conv_ref[...], gfeat_ref[...],
                                 (((1,), (1,)), ((), ())),
                                 preferred_element_type=jnp.float32)
    # mask padded sequence positions (rows >= lp inside each lp_pad segment)
    pos = jax.lax.broadcasted_iota(jnp.int32, (b_tile * lp_pad, 1), 0) % lp_pad
    scores_ref[...] = jnp.where(pos < lp, scores, -1e30)

    bidx = jax.lax.broadcasted_iota(jnp.int32, (b_tile, 1), 0)
    out_val = jnp.zeros((b_tile, n_tile), jnp.float32)
    for b in range(b_tile):                                  # small static loop
        r0 = b * lp_pad
        s_b = scores_ref[r0:r0 + lp_pad, :]                  # [lp_pad, n_tile]
        # label-wise attention: softmax over sequence positions (torch dim=1).
        m = jnp.max(s_b, axis=0, keepdims=True)
        ex = jnp.exp(s_b - m)                                # masked rows -> exactly 0
        # approx reciprocal on the EUP; tiny deviation from exact softmax.
        inv = pl.reciprocal(jnp.sum(ex, axis=0, keepdims=True), approx=True)
        atten_b = (ex * inv).astype(jnp.bfloat16)

        conv_b = conv_ref[r0:r0 + lp_pad, :]                 # [lp_pad, nK] bf16
        # abstract_content[b]^T is already [nK, n_tile]: contract over Lp.
        content_t = jax.lax.dot_general(conv_b, atten_b,
                                        (((0,), (0,)), ((), ())),
                                        preferred_element_type=jnp.float32)
        content_t = content_t.astype(jnp.bfloat16)

        # content_final + tanh fused with the label-feature dot, processed in
        # 128-row feature chunks so the [2E, n_tile] f32 temporary never lives
        # in vregs all at once.
        row = jnp.zeros((1, n_tile), jnp.float32)
        for c in range(f_chunks):
            f0 = c * LANE
            xf = jnp.tanh(jnp.dot(wfin_t_ref[f0:f0 + LANE, :], content_t,
                                  preferred_element_type=jnp.float32)
                          + bfin_t_ref[f0:f0 + LANE, :])
            row = row + jnp.sum(xf * lf_t_ref[f0:f0 + LANE, :],
                                axis=0, keepdims=True)
        out_val = out_val + jnp.where(bidx == b, jax.nn.sigmoid(row), 0.0)

    out_ref[...] = out_val                                   # one lane-dense store


def atten_final(emb_unfold, wconv_flat, bconv, gfeat16, wfin_t, bfin_t, lf_t, *,
                lp, lp_pad, b_tile, n_tile):
    rows_total, kfe = emb_unfold.shape
    b_pad = rows_total // lp_pad
    nk_pad = wconv_flat.shape[1]
    n_pad, e_pad = gfeat16.shape
    two_e = lf_t.shape[0]
    grid = (b_pad // b_tile, n_pad // n_tile)
    flops = (grid[0] * 2 * (b_tile * lp_pad) * kfe * nk_pad
             + grid[0] * grid[1] * (2 * (b_tile * lp_pad) * nk_pad * n_tile
                                    + b_tile * (2 * lp_pad * nk_pad * n_tile
                                                + 2 * two_e * nk_pad * n_tile)))
    transcendentals = grid[0] * grid[1] * b_tile * (lp_pad * n_tile
                                                    + two_e * n_tile + n_tile)
    bytes_accessed = sum(_nbytes(x) for x in
                         (emb_unfold, wconv_flat, bconv, gfeat16, wfin_t,
                          bfin_t, lf_t)) + b_pad * n_pad * 4
    kern = functools.partial(atten_final_kernel, b_tile=b_tile, lp=lp,
                             lp_pad=lp_pad)
    return pl.pallas_call(
        kern,
        out_shape=jax.ShapeDtypeStruct((b_pad, n_pad), jnp.float32),
        grid=grid,
        in_specs=[
            pl.BlockSpec((b_tile * lp_pad, kfe), lambda i, j: (i, 0)),
            pl.BlockSpec((kfe, nk_pad), lambda i, j: (0, 0)),
            pl.BlockSpec((1, nk_pad), lambda i, j: (0, 0)),
            pl.BlockSpec((n_tile, e_pad), lambda i, j: (j, 0)),
            pl.BlockSpec((two_e, nk_pad), lambda i, j: (0, 0)),
            pl.BlockSpec((two_e, 1), lambda i, j: (0, 0)),
            pl.BlockSpec((two_e, n_tile), lambda i, j: (0, j)),
        ],
        out_specs=pl.BlockSpec((b_tile, n_tile), lambda i, j: (i, j)),
        scratch_shapes=[pltpu.VMEM((b_tile * lp_pad, nk_pad), jnp.bfloat16),
                        pltpu.VMEM((b_tile * lp_pad, n_tile), jnp.float32)],
        compiler_params=pltpu.CompilerParams(
            dimension_semantics=("parallel", "arbitrary"),
            vmem_limit_bytes=VMEM_LIMIT),
        cost_estimate=pl.CostEstimate(flops=int(flops),
                                      transcendentals=int(transcendentals),
                                      bytes_accessed=int(bytes_accessed)),
    )(emb_unfold, wconv_flat, bconv, gfeat16, wfin_t, bfin_t, lf_t)


# ------------------------------------------------------------------ full model
def mesh_rgcn_forward(input_seq, g_node_feat, A, emb_table, wconv, bconv,
                      wfin, bfin, rgcn_params, ksz, *, b_tile=8, n_tile=128):
    n_nodes, e_dim = g_node_feat.shape
    num_rels = A.shape[0]
    nk = wconv.shape[2]
    assert nk == e_dim, "MeSH_RGCN requires nKernel == embedding_dim"
    (w1, b1), (w2, b2), (w3, b3) = rgcn_params

    e_pad = _round_up(e_dim, LANE)
    h_pad = _round_up(w1.shape[2], LANE)
    nk_pad = _round_up(nk, LANE)
    n_pad = _round_up(n_nodes, LANE)
    n_tile = min(n_tile, n_pad)
    if n_pad % n_tile != 0:
        n_tile = LANE

    # ---- graph / RGCN side.  Zero padding keeps the math exact.
    g_pad = _pad_to(g_node_feat, (n_pad, e_pad))                       # f32
    g16 = g_pad.astype(jnp.bfloat16)
    # lane-concat of the per-relation adjacencies: a_cat[i, r*N + j] = A[r, i, j]
    # NOTE: bf16 A (edge_norm = 1/in_degree) loses ~3 significant digits.
    a_pad = _pad_to(A, (num_rels, n_pad, n_pad))
    a_cat = jnp.transpose(a_pad, (1, 0, 2)).reshape(
        n_pad, num_rels * n_pad).astype(jnp.bfloat16)

    def batched_w(W, din_p, dout_p):
        Wp = _pad_to(W, (num_rels, din_p, dout_p))
        return jnp.transpose(Wp, (1, 0, 2)).reshape(
            din_p, num_rels * dout_p).astype(jnp.bfloat16)

    w1_all = batched_w(w1, e_pad, h_pad)
    w2_all = batched_w(w2, h_pad, h_pad)
    w3_all = batched_w(w3, h_pad, e_pad)
    b1p = _pad_to(b1, (1, h_pad))
    b2p = _pad_to(b2, (1, h_pad))
    b3p = _pad_to(b3, (1, e_pad))

    msg_stack = rgcn_hidden(g16, a_cat, w1_all, b1p, w2_all, b2p, w3_all,
                            num_rels=num_rels)                 # [R*N, E] bf16
    label_feature = rgcn_aggregate(a_cat, msg_stack, b3p, g_pad)  # [N, 2E] f32
    lf_t = label_feature.T                                        # [2E, N]  f32

    # ---- attention CNN side (embedding gather + im2col unfold = XLA glue).
    batch, seq_len = input_seq.shape
    lp = seq_len - ksz + 1
    lp_pad = _round_up(lp, 8)
    bt = min(b_tile, batch)
    b_pad = _round_up(batch, bt)
    if b_pad != batch:
        input_seq = jnp.pad(input_seq, ((0, b_pad - batch), (0, 0)))
    embedded = jnp.take(emb_table.astype(jnp.bfloat16), input_seq, axis=0)
    embedded = _pad_to(embedded, (b_pad, seq_len, e_pad))
    windows = jnp.stack([embedded[:, j:j + lp, :] for j in range(ksz)], axis=2)
    emb_unfold = windows.reshape(b_pad, lp, ksz * e_pad)
    emb_unfold = _pad_to(emb_unfold, (b_pad, lp_pad, ksz * e_pad)).reshape(
        b_pad * lp_pad, ksz * e_pad)

    wconv_flat = _pad_to(wconv, (ksz, e_pad, nk_pad)).reshape(
        ksz * e_pad, nk_pad).astype(jnp.bfloat16)
    bconv_p = _pad_to(bconv, (1, nk_pad))
    # content_final weights padded so their rows line up with the padded
    # [h3 | g] halves of label_feature, then transposed for the [2E, N] fuse.
    wfin_t = _pad_to(wfin.reshape(nk, 2, e_dim), (nk_pad, 2, e_pad)).reshape(
        nk_pad, 2 * e_pad).T.astype(jnp.bfloat16)
    bfin_t = _pad_to(bfin.reshape(1, 2, e_dim), (1, 2, e_pad)).reshape(
        1, 2 * e_pad).T                                        # [2E, 1] f32

    out = atten_final(emb_unfold, wconv_flat, bconv_p, g16, wfin_t, bfin_t,
                      lf_t, lp=lp, lp_pad=lp_pad, b_tile=bt, n_tile=n_tile)
    return out[:batch, :n_nodes]


# ------------------------------------------------------------------ pure-JAX reference
def reference_forward(input_seq, g_node_feat, A, emb_table, wconv, bconv,
                      wfin, bfin, rgcn_params, ksz, compute_dtype=jnp.float32):
    """Pure-JAX reference.  compute_dtype=bfloat16 mirrors the kernels'
    mixed precision (bf16 MXU operands, f32 accumulation); float32 reproduces
    the original full-precision semantics of the PyTorch module."""
    c = lambda x: x.astype(compute_dtype)
    f32 = jnp.float32
    a_c = c(A)

    h = g_node_feat
    n_layers = len(rgcn_params)
    for li, (w, bias) in enumerate(rgcn_params):
        h16 = c(h)
        acc = jnp.zeros((h.shape[0], w.shape[2]), f32)
        for r in range(w.shape[0]):
            msg = jnp.dot(h16, c(w[r]), preferred_element_type=f32)
            acc = acc + jnp.dot(a_c[r], c(msg), preferred_element_type=f32)
        acc = acc + bias
        h = jnp.maximum(acc, 0.0) if li < n_layers - 1 else acc
    lf = jnp.concatenate([h, g_node_feat], axis=1)

    emb = c(jnp.take(emb_table, input_seq, axis=0))
    lp = emb.shape[1] - ksz + 1
    conv = jnp.zeros((emb.shape[0], lp, wconv.shape[2]), f32)
    for j in range(ksz):
        conv = conv + jnp.einsum('ble,ek->blk', emb[:, j:j + lp, :], c(wconv[j]),
                                 preferred_element_type=f32)
    conv = jnp.maximum(conv + bconv[None], 0.0)
    conv16 = c(conv)
    scores = jnp.einsum('blk,nk->bln', conv16, c(g_node_feat),
                        preferred_element_type=f32)
    atten = jax.nn.softmax(scores, axis=1)
    content = jnp.einsum('bln,blk->bnk', c(atten), conv16,
                         preferred_element_type=f32)
    xf = jnp.tanh(jnp.einsum('bnk,kf->bnf', c(content), c(wfin),
                             preferred_element_type=f32) + bfin[None])
    logits = jnp.sum(xf * lf[None], axis=2)
    return jax.nn.sigmoid(logits)


if __name__ == "__main__":
    # Small, model-consistent shapes (N a multiple of 128 so the label / row
    # tilings produce genuinely multi-step grids; E/hidden/nK show lane padding).
    B, L = 16, 16          # batch, sequence length
    vocab_size = 97
    E = 64                 # embedding_dim (node-feature dim == RGCN in/out dim)
    nK = E                 # nKernel must equal node-feature dim for the attention matmul
    ksz = 3
    hidden = 32            # hidden_rgcn_size
    N = 256                # number of graph nodes (MeSH labels)
    R = 2                  # num_rels
    n_edges = 1024

    key = jax.random.PRNGKey(0)
    keys = jax.random.split(key, 16)

    input_seq = jax.random.randint(keys[0], (B, L), 0, vocab_size)
    g_node_feat = jax.random.normal(keys[1], (N, E), jnp.float32)

    # synthetic relational graph -> dense per-relation adjacency A[r, dst, src]
    src = jax.random.randint(keys[2], (n_edges,), 0, N)
    dst = jax.random.randint(keys[3], (n_edges,), 0, N)
    etype = jax.random.randint(keys[4], (n_edges,), 0, R)
    in_deg = jnp.zeros((N,), jnp.float32).at[dst].add(1.0)
    edge_norm = 1.0 / jnp.maximum(in_deg[dst], 1.0)
    A = jnp.zeros((R, N, N), jnp.float32).at[etype, dst, src].add(edge_norm)

    # attenCNN parameters
    emb_table = 0.1 * jax.random.normal(keys[5], (vocab_size, E), jnp.float32)
    wconv = 0.1 * jax.random.normal(keys[6], (ksz, E, nK), jnp.float32)
    bconv = 0.1 * jax.random.normal(keys[7], (1, nK), jnp.float32)
    wfin = (1.0 / jnp.sqrt(nK)) * jax.random.normal(keys[8], (nK, 2 * E), jnp.float32)
    bfin = jnp.zeros((1, 2 * E), jnp.float32)                  # nn.init.zeros_

    # RGCN (basis decomposition, num_bases == num_rels), 3 layers: E->H->H->E
    dims = [(E, hidden), (hidden, hidden), (hidden, E)]
    rgcn_params = []
    for li, (din, dout) in enumerate(dims):
        basis = (0.5 / jnp.sqrt(din)) * jax.random.normal(
            keys[9 + 2 * li], (R, din, dout), jnp.float32)
        comp = jax.random.normal(keys[10 + 2 * li], (R, R), jnp.float32)
        W = jnp.einsum('rb,bio->rio', comp, basis)             # per-relation weights
        bias = jnp.zeros((1, dout), jnp.float32)
        rgcn_params.append((W, bias))

    out = mesh_rgcn_forward(input_seq, g_node_feat, A, emb_table, wconv, bconv,
                            wfin, bfin, rgcn_params, ksz)
    out = jax.block_until_ready(out)
    assert out.shape == (B, N)

    # Primary check: matched mixed-precision (bf16 operands, f32 accumulation).
    ref_bf16 = reference_forward(input_seq, g_node_feat, A, emb_table, wconv,
                                 bconv, wfin, bfin, rgcn_params, ksz,
                                 compute_dtype=jnp.bfloat16)
    err_bf16 = float(jnp.max(jnp.abs(out - ref_bf16)))
    assert jnp.allclose(out, ref_bf16, atol=1e-2, rtol=1e-2), err_bf16

    # Sanity check against the original full-f32 semantics.
    ref_f32 = reference_forward(input_seq, g_node_feat, A, emb_table, wconv,
                                bconv, wfin, bfin, rgcn_params, ksz,
                                compute_dtype=jnp.float32)
    err_f32 = float(jnp.max(jnp.abs(out - ref_f32)))
    assert jnp.allclose(out, ref_f32, atol=5e-2, rtol=5e-2), err_f32

    print("KERNEL_OK")
</pallas_src>

<mosaic_0001>
module attributes {stable_mosaic.version = 11 : i64} {
  func.func @rgcn_hidden_kernel(%arg0: i32, %arg1: memref<256x128xbf16, #tpu.memory_space<vmem>>, %arg2: memref<256x512xbf16, #tpu.memory_space<vmem>>, %arg3: memref<128x256xbf16, #tpu.memory_space<vmem>>, %arg4: memref<1x128xf32, #tpu.memory_space<vmem>>, %arg5: memref<128x256xbf16, #tpu.memory_space<vmem>>, %arg6: memref<1x128xf32, #tpu.memory_space<vmem>>, %arg7: memref<128x256xbf16, #tpu.memory_space<vmem>>, %arg8: memref<512x128xbf16, #tpu.memory_space<vmem>>) attributes {dimension_semantics = [#tpu.dimension_semantics<arbitrary>], iteration_bounds = array<i64: 1>, scalar_prefetch = 0 : i64, scratch_operands = 0 : i64, tpu.core_type = #tpu.core_type<tc>, window_params = [{pipeline_mode = #tpu.pipeline_mode<synchronous>, transform_indices = @transform_0, window_bounds = array<i64: 256, 128>}, {pipeline_mode = #tpu.pipeline_mode<synchronous>, transform_indices = @transform_1, window_bounds = array<i64: 256, 512>}, {pipeline_mode = #tpu.pipeline_mode<synchronous>, transform_indices = @transform_2, window_bounds = array<i64: 128, 256>}, {pipeline_mode = #tpu.pipeline_mode<synchronous>, transform_indices = @transform_3, window_bounds = array<i64: 1, 128>}, {pipeline_mode = #tpu.pipeline_mode<synchronous>, transform_indices = @transform_4, window_bounds = array<i64: 128, 256>}, {pipeline_mode = #tpu.pipeline_mode<synchronous>, transform_indices = @transform_5, window_bounds = array<i64: 1, 128>}, {pipeline_mode = #tpu.pipeline_mode<synchronous>, transform_indices = @transform_6, window_bounds = array<i64: 128, 256>}, {pipeline_mode = #tpu.pipeline_mode<synchronous>, transform_indices = @transform_7, window_bounds = array<i64: 512, 128>}]} {
    %c0 = arith.constant 0 : index
    %c0_0 = arith.constant 0 : index
    %0 = vector.load %arg1[%c0, %c0_0] : memref<256x128xbf16, #tpu.memory_space<vmem>>, vector<256x128xbf16>
    %c0_1 = arith.constant 0 : index
    %c0_2 = arith.constant 0 : index
    %1 = vector.load %arg3[%c0_1, %c0_2] : memref<128x256xbf16, #tpu.memory_space<vmem>>, vector<128x256xbf16>
    %cst = arith.constant dense<0.000000e+00> : vector<256x256xf32>
    %2 = tpu.matmul %0, %1, %cst {dimension_numbers = #tpu.dot_dimension_numbers<[1], [0], [0], [1], [0, 0, 1, 1], [], []>} : vector<256x128xbf16>, vector<128x256xbf16>, vector<256x256xf32> -> vector<256x256xf32>
    %3 = arith.truncf %2 : vector<256x256xf32> to vector<256x256xbf16>
    %cst_3 = arith.constant 0.000000e+00 : f32
    %4 = vector.broadcast %cst_3 : f32 to vector<256x128xf32>
    %c0_4 = arith.constant 0 : index
    %c0_5 = arith.constant 0 : index
    %5 = vector.load %arg2[%c0_4, %c0_5] : memref<256x512xbf16, #tpu.memory_space<vmem>>, vector<256x256xbf16>
    %6 = vector.extract_strided_slice %3 {offsets = [0, 0], sizes = [256, 128], strides = [1, 1]} : vector<256x256xbf16> to vector<256x128xbf16>
    %cst_6 = arith.constant dense<0.000000e+00> : vector<256x128xf32>
    %7 = tpu.matmul %5, %6, %cst_6 {dimension_numbers = #tpu.dot_dimension_numbers<[1], [0], [0], [1], [0, 0, 1, 1], [], []>} : vector<256x256xbf16>, vector<256x128xbf16>, vector<256x128xf32> -> vector<256x128xf32>
    %8 = arith.addf %4, %7 : vector<256x128xf32>
    %c0_7 = arith.constant 0 : index
    %c256 = arith.constant 256 : index
    %9 = vector.load %arg2[%c0_7, %c256] : memref<256x512xbf16, #tpu.memory_space<vmem>>, vector<256x256xbf16>
    %10 = vector.extract_strided_slice %3 {offsets = [0, 128], sizes = [256, 128], strides = [1, 1]} : vector<256x256xbf16> to vector<256x128xbf16>
    %cst_8 = arith.constant dense<0.000000e+00> : vector<256x128xf32>
    %11 = tpu.matmul %9, %10, %cst_8 {dimension_numbers = #tpu.dot_dimension_numbers<[1], [0], [0], [1], [0, 0, 1, 1], [], []>} : vector<256x256xbf16>, vector<256x128xbf16>, vector<256x128xf32> -> vector<256x128xf32>
    %12 = arith.addf %8, %11 : vector<256x128xf32>
    %c0_9 = arith.constant 0 : index
    %c0_10 = arith.constant 0 : index
    %13 = vector.load %arg4[%c0_9, %c0_10] : memref<1x128xf32, #tpu.memory_space<vmem>>, vector<1x128xf32>
    %14 = vector.broadcast %13 : vector<1x128xf32> to vector<256x128xf32>
    %15 = arith.addf %12, %14 : vector<256x128xf32>
    %cst_11 = arith.constant 0.000000e+00 : f32
    %16 = vector.broadcast %cst_11 : f32 to vector<256x128xf32>
    %17 = arith.maximumf %15, %16 : vector<256x128xf32>
    %18 = arith.truncf %17 : vector<256x128xf32> to vector<256x128xbf16>
    %c0_12 = arith.constant 0 : index
    %c0_13 = arith.constant 0 : index
    %19 = vector.load %arg5[%c0_12, %c0_13] : memref<128x256xbf16, #tpu.memory_space<vmem>>, vector<128x256xbf16>
    %cst_14 = arith.constant dense<0.000000e+00> : vector<256x256xf32>
    %20 = tpu.matmul %18, %19, %cst_14 {dimension_numbers = #tpu.dot_dimension_numbers<[1], [0], [0], [1], [0, 0, 1, 1], [], []>} : vector<256x128xbf16>, vector<128x256xbf16>, vector<256x256xf32> -> vector<256x256xf32>
    %21 = arith.truncf %20 : vector<256x256xf32> to vector<256x256xbf16>
    %cst_15 = arith.constant 0.000000e+00 : f32
    %22 = vector.broadcast %cst_15 : f32 to vector<256x128xf32>
    %c0_16 = arith.constant 0 : index
    %c0_17 = arith.constant 0 : index
    %23 = vector.load %arg2[%c0_16, %c0_17] : memref<256x512xbf16, #tpu.memory_space<vmem>>, vector<256x256xbf16>
    %24 = vector.extract_strided_slice %21 {offsets = [0, 0], sizes = [256, 128], strides = [1, 1]} : vector<256x256xbf16> to vector<256x128xbf16>
    %cst_18 = arith.constant dense<0.000000e+00> : vector<256x128xf32>
    %25 = tpu.matmul %23, %24, %cst_18 {dimension_numbers = #tpu.dot_dimension_numbers<[1], [0], [0], [1], [0, 0, 1, 1], [], []>} : vector<256x256xbf16>, vector<256x128xbf16>, vector<256x128xf32> -> vector<256x128xf32>
    %26 = arith.addf %22, %25 : vector<256x128xf32>
    %c0_19 = arith.constant 0 : index
    %c256_20 = arith.constant 256 : index
    %27 = vector.load %arg2[%c0_19, %c256_20] : memref<256x512xbf16, #tpu.memory_space<vmem>>, vector<256x256xbf16>
    %28 = vector.extract_strided_slice %21 {offsets = [0, 128], sizes = [256, 128], strides = [1, 1]} : vector<256x256xbf16> to vector<256x128xbf16>
    %cst_21 = arith.constant dense<0.000000e+00> : vector<256x128xf32>
    %29 = tpu.matmul %27, %28, %cst_21 {dimension_numbers = #tpu.dot_dimension_numbers<[1], [0], [0], [1], [0, 0, 1, 1], [], []>} : vector<256x256xbf16>, vector<256x128xbf16>, vector<256x128xf32> -> vector<256x128xf32>
    %30 = arith.addf %26, %29 : vector<256x128xf32>
    %c0_22 = arith.constant 0 : index
    %c0_23 = arith.constant 0 : index
    %31 = vector.load %arg6[%c0_22, %c0_23] : memref<1x128xf32, #tpu.memory_space<vmem>>, vector<1x128xf32>
    %32 = vector.broadcast %31 : vector<1x128xf32> to vector<256x128xf32>
    %33 = arith.addf %30, %32 : vector<256x128xf32>
    %cst_24 = arith.constant 0.000000e+00 : f32
    %34 = vector.broadcast %cst_24 : f32 to vector<256x128xf32>
    %35 = arith.maximumf %33, %34 : vector<256x128xf32>
    %36 = arith.truncf %35 : vector<256x128xf32> to vector<256x128xbf16>
    %c0_25 = arith.constant 0 : index
    %c0_26 = arith.constant 0 : index
    %37 = vector.load %arg7[%c0_25, %c0_26] : memref<128x256xbf16, #tpu.memory_space<vmem>>, vector<128x256xbf16>
    %cst_27 = arith.constant dense<0.000000e+00> : vector<256x256xf32>
    %38 = tpu.matmul %36, %37, %cst_27 {dimension_numbers = #tpu.dot_dimension_numbers<[1], [0], [0], [1], [0, 0, 1, 1], [], []>} : vector<256x128xbf16>, vector<128x256xbf16>, vector<256x256xf32> -> vector<256x256xf32>
    %39 = arith.truncf %38 : vector<256x256xf32> to vector<256x256xbf16>
    %40 = vector.extract_strided_slice %39 {offsets = [0, 0], sizes = [256, 128], strides = [1, 1]} : vector<256x256xbf16> to vector<256x128xbf16>
    %c0_28 = arith.constant 0 : index
    %c0_29 = arith.constant 0 : index
    %41 = vector.load %arg8[%c0_28, %c0_29] : memref<512x128xbf16, #tpu.memory_space<vmem>>, vector<256x128xbf16>
    tpu.vector_store %arg8[%c0_28, %c0_29], %40 {strides = array<i32>} : memref<512x128xbf16, #tpu.memory_space<vmem>>, vector<256x128xbf16>,
    %42 = vector.extract_strided_slice %39 {offsets = [0, 128], sizes = [256, 128], strides = [1, 1]} : vector<256x256xbf16> to vector<256x128xbf16>
    %c256_30 = arith.constant 256 : index
    %c0_31 = arith.constant 0 : index
    %43 = vector.load %arg8[%c256_30, %c0_31] : memref<512x128xbf16, #tpu.memory_space<vmem>>, vector<256x128xbf16>
    tpu.vector_store %arg8[%c256_30, %c0_31], %42 {strides = array<i32>} : memref<512x128xbf16, #tpu.memory_space<vmem>>, vector<256x128xbf16>,
    return
  }
  func.func @transform_0(%arg0: i32) -> (i32, i32) {
    %c0_i32 = arith.constant 0 : i32
    %c0_i32_0 = arith.constant 0 : i32
    %c0_i32_1 = arith.constant 0 : i32
    return %c0_i32, %c0_i32_0 : i32, i32
  }
  func.func @transform_1(%arg0: i32) -> (i32, i32) {
    %c0_i32 = arith.constant 0 : i32
    %c0_i32_0 = arith.constant 0 : i32
    %c0_i32_1 = arith.constant 0 : i32
    return %c0_i32, %c0_i32_0 : i32, i32
  }
  func.func @transform_2(%arg0: i32) -> (i32, i32) {
    %c0_i32 = arith.constant 0 : i32
    %c0_i32_0 = arith.constant 0 : i32
    %c0_i32_1 = arith.constant 0 : i32
    return %c0_i32, %c0_i32_0 : i32, i32
  }
  func.func @transform_3(%arg0: i32) -> (i32, i32) {
    %c0_i32 = arith.constant 0 : i32
    %c0_i32_0 = arith.constant 0 : i32
    %c0_i32_1 = arith.constant 0 : i32
    return %c0_i32, %c0_i32_0 : i32, i32
  }
  func.func @transform_4(%arg0: i32) -> (i32, i32) {
    %c0_i32 = arith.constant 0 : i32
    %c0_i32_0 = arith.constant 0 : i32
    %c0_i32_1 = arith.constant 0 : i32
    return %c0_i32, %c0_i32_0 : i32, i32
  }
  func.func @transform_5(%arg0: i32) -> (i32, i32) {
    %c0_i32 = arith.constant 0 : i32
    %c0_i32_0 = arith.constant 0 : i32
    %c0_i32_1 = arith.constant 0 : i32
    return %c0_i32, %c0_i32_0 : i32, i32
  }
  func.func @transform_6(%arg0: i32) -> (i32, i32) {
    %c0_i32 = arith.constant 0 : i32
    %c0_i32_0 = arith.constant 0 : i32
    %c0_i32_1 = arith.constant 0 : i32
    return %c0_i32, %c0_i32_0 : i32, i32
  }
  func.func @transform_7(%arg0: i32) -> (i32, i32) {
    %c0_i32 = arith.constant 0 : i32
    %c0_i32_0 = arith.constant 0 : i32
    %c0_i32_1 = arith.constant 0 : i32
    return %c0_i32, %c0_i32_0 : i32, i32
  }
}

</mosaic_0001>

<llo_original>
// kernel: tpu_custom_call.1
$region0: #{tpu_custom_call.1}
  #allocation0 [shape = 'u32[]', space=smem, size = 0x4, offset = 0x4, fixed_abs, tag = 'smem constant byte address 0x4 - core index']
  #allocation1 [shape = 'u32[72,128]{1,0:T(1,128)}', space=vmem, size = 0x9000, scoped, tag = 'internal scratch']
  %s0 = inlined_call_operand.hbm [shape: bf16[256,128], index: 0, kind: input, shape index: {}]
  %s1 = inlined_call_operand.hbm [shape: bf16[256,512], index: 1, kind: input, shape index: {}]
  %s2 = inlined_call_operand.hbm [shape: bf16[128,256], index: 2, kind: input, shape index: {}]
  %s3 = inlined_call_operand.vmem [shape: f32[1,128], index: 3, kind: input, shape index: {}]
  %s4 = inlined_call_operand.hbm [shape: bf16[128,256], index: 4, kind: input, shape index: {}]
  %s5 = inlined_call_operand.vmem [shape: f32[1,128], index: 5, kind: input, shape index: {}]
  %s6 = inlined_call_operand.hbm [shape: bf16[128,256], index: 6, kind: input, shape index: {}]
  %s7 = inlined_call_operand.hbm [shape: bf16[512,128], index: 7, kind: output, shape index: {}]
  %s8 = sld [smem:[#allocation0]]
  $region58: #{tpu_custom_call.1} parent=0
    _
  %s10 = ssub.s32 1, %s8
  %s11 = scalar_select 0, %s10, %s8
  $region1: #{tpu_custom_call.1} parent=0
    #allocation2 [shape = 'u8[65536]{0}', space=vmem, size = 0x10000, scoped, tag = 'input window, operand 0, single buffered']
    #allocation3 [shape = 's32[1]{0}', space=sflag, size = 0x4, scoped, tag = 'scoped memory for tpu_custom_call.1']
    #allocation4 [shape = 's32[1]{0}', space=sflag, size = 0x4, scoped, tag = 'scoped memory for tpu_custom_call.1']
    #allocation5 [shape = 'u8[262144]{0}', space=vmem, size = 0x40000, scoped, tag = 'input window, operand 1, single buffered']
    #allocation6 [shape = 's32[1]{0}', space=sflag, size = 0x4, scoped, tag = 'scoped memory for tpu_custom_call.1']
    #allocation7 [shape = 'u8[65536]{0}', space=vmem, size = 0x10000, scoped, tag = 'input window, operand 2, single buffered']
    #allocation8 [shape = 'u8[65536]{0}', space=vmem, size = 0x10000, scoped, tag = 'input window, operand 4, single buffered']
    #allocation9 [shape = 's32[1]{0}', space=sflag, size = 0x4, scoped, tag = 'scoped memory for tpu_custom_call.1']
    #allocation10 [shape = 'u8[65536]{0}', space=vmem, size = 0x10000, scoped, tag = 'input window, operand 6, single buffered']
    #allocation11 [shape = 'u8[131072]{0}', space=vmem, size = 0x20000, scoped, tag = 'output window, operand 0, single buffered']
    %12 = vsyncpa [#allocation3], 0
    %13 = vsyncpa [#allocation6], 0
    %14 = vsyncpa [#allocation9], 0
    %15 = vsyncpa [#allocation4], 0
    // Predicated region
    $region2: #{tpu_custom_call.1} parent=1 // pred_check
      _
    $region3: #{tpu_custom_call.1} parent=1 // pred_check_branch
      %17 = sbr.rel (0) target = $region5
    $region4: #{tpu_custom_call.1} parent=1 // pred_region
      %19 = vsyncadd [#allocation3], 0
      %s20 = sshll.u32 %s0, 4
      %s21 = int_to_ptr.hbm [resolvable:$true] %s20
      %s22 = sshll.u32 [#allocation2], 4
      %s23 = int_to_ptr.vmem [resolvable:$true] %s22
      %28 = dma.hbm_to_vmem [thread:$0]  %s21, 2048, %s23, [#allocation3], 64, 64, 4
    $region5: #{tpu_custom_call.1} parent=1 // pred_fallthru
      _
    // Predicated region
    $region6: #{tpu_custom_call.1} parent=1 // pred_check
      _
    $region7: #{tpu_custom_call.1} parent=1 // pred_check_branch
      %30 = sbr.rel (0) target = $region9
    $region8: #{tpu_custom_call.1} parent=1 // pred_region
      %32 = vsyncadd [#allocation6], 0
      %s33 = sshll.u32 %s1, 4
      %s34 = int_to_ptr.hbm [resolvable:$true] %s33
      %s35 = sshll.u32 [#allocation5], 4
      %s36 = int_to_ptr.vmem [resolvable:$true] %s35
      %41 = dma.hbm_to_vmem [thread:$0]  %s34, 8192, %s36, [#allocation6], 256, 256, 16
    $region9: #{tpu_custom_call.1} parent=1 // pred_fallthru
      _
    // Predicated region
    $region10: #{tpu_custom_call.1} parent=1 // pred_check
      _
    $region11: #{tpu_custom_call.1} parent=1 // pred_check_branch
      %43 = sbr.rel (0) target = $region13
    $region12: #{tpu_custom_call.1} parent=1 // pred_region
      %45 = vsyncadd [#allocation6], 0
      %s46 = sshll.u32 %s2, 4
      %s47 = int_to_ptr.hbm [resolvable:$true] %s46
      %s48 = sshll.u32 [#allocation7], 4
      %s49 = int_to_ptr.vmem [resolvable:$true] %s48
      %54 = dma.hbm_to_vmem [thread:$0]  %s47, 2048, %s49, [#allocation6], 128, 128, 8
    $region13: #{tpu_custom_call.1} parent=1 // pred_fallthru
      _
    // Predicated region
    $region14: #{tpu_custom_call.1} parent=1 // pred_check
      _
    $region15: #{tpu_custom_call.1} parent=1 // pred_check_branch
      %56 = sbr.rel (0) target = $region17
    $region16: #{tpu_custom_call.1} parent=1 // pred_region
      _
    $region17: #{tpu_custom_call.1} parent=1 // pred_fallthru
      _
    // Predicated region
    $region18: #{tpu_custom_call.1} parent=1 // pred_check
      _
    $region19: #{tpu_custom_call.1} parent=1 // pred_check_branch
      %58 = sbr.rel (0) target = $region21
    $region20: #{tpu_custom_call.1} parent=1 // pred_region
      %60 = vsyncadd [#allocation9], 0
      %s61 = sshll.u32 %s4, 4
      %s62 = int_to_ptr.hbm [resolvable:$true] %s61
      %s63 = sshll.u32 [#allocation8], 4
      %s64 = int_to_ptr.vmem [resolvable:$true] %s63
      %69 = dma.hbm_to_vmem [thread:$0]  %s62, 2048, %s64, [#allocation9], 128, 128, 8
    $region21: #{tpu_custom_call.1} parent=1 // pred_fallthru
      _
    // Predicated region
    $region22: #{tpu_custom_call.1} parent=1 // pred_check
      _
    $region23: #{tpu_custom_call.1} parent=1 // pred_check_branch
      %71 = sbr.rel (0) target = $region25
    $region24: #{tpu_custom_call.1} parent=1 // pred_region
      _
    $region25: #{tpu_custom_call.1} parent=1 // pred_fallthru
      _
    // Predicated region
    $region26: #{tpu_custom_call.1} parent=1 // pred_check
      _
    $region27: #{tpu_custom_call.1} parent=1 // pred_check_branch
      %73 = sbr.rel (0) target = $region29
    $region28: #{tpu_custom_call.1} parent=1 // pred_region
      %75 = vsyncadd [#allocation9], 0
      %s76 = sshll.u32 %s6, 4
      %s77 = int_to_ptr.hbm [resolvable:$true] %s76
      %s78 = sshll.u32 [#allocation10], 4
      %s79 = int_to_ptr.vmem [resolvable:$true] %s78
      %84 = dma.hbm_to_vmem [thread:$0]  %s77, 2048, %s79, [#allocation9], 128, 128, 8
    $region29: #{tpu_custom_call.1} parent=1 // pred_fallthru
      _
    // Predicated region
    $region30: #{tpu_custom_call.1} parent=1 // pred_check
      _
    $region31: #{tpu_custom_call.1} parent=1 // pred_check_branch
      %86 = sbr.rel (0) target = $region33
    $region32: #{tpu_custom_call.1} parent=1 // pred_region
      %88 = dma.done [#allocation3], 2048
    $region33: #{tpu_custom_call.1} parent=1 // pred_fallthru
      _
    // Predicated region
    $region34: #{tpu_custom_call.1} parent=1 // pred_check
      _
    $region35: #{tpu_custom_call.1} parent=1 // pred_check_branch
      %90 = sbr.rel (0) target = $region37
    $region36: #{tpu_custom_call.1} parent=1 // pred_region
      %92 = dma.done [#allocation6], 8192
    $region37: #{tpu_custom_call.1} parent=1 // pred_fallthru
      _
    // Predicated region
    $region38: #{tpu_custom_call.1} parent=1 // pred_check
      _
    $region39: #{tpu_custom_call.1} parent=1 // pred_check_branch
      %94 = sbr.rel (0) target = $region41
    $region40: #{tpu_custom_call.1} parent=1 // pred_region
      %96 = dma.done [#allocation6], 2048
    $region41: #{tpu_custom_call.1} parent=1 // pred_fallthru
      _
    // Predicated region
    $region42: #{tpu_custom_call.1} parent=1 // pred_check
      _
    $region43: #{tpu_custom_call.1} parent=1 // pred_check_branch
      %98 = sbr.rel (0) target = $region45
    $region44: #{tpu_custom_call.1} parent=1 // pred_region
      %100 = dma.done [#allocation9], 2048
    $region45: #{tpu_custom_call.1} parent=1 // pred_fallthru
      _
    // Predicated region
    $region46: #{tpu_custom_call.1} parent=1 // pred_check
      _
    $region47: #{tpu_custom_call.1} parent=1 // pred_check_branch
      %102 = sbr.rel (0) target = $region49
    $region48: #{tpu_custom_call.1} parent=1 // pred_region
      %104 = dma.done [#allocation9], 2048
    $region49: #{tpu_custom_call.1} parent=1 // pred_fallthru
      _
    %v105 = vld [vmem:[#allocation2] sm:$0xf]
    %v106 = vld [vmem:[#allocation2 + $0x4] sm:$0xf]
    %v107 = vld [vmem:[#allocation2 + $0x8] sm:$0xf]
    %v108 = vld [vmem:[#allocation2 + $0xc] sm:$0xf]
    %v109 = vld [vmem:[#allocation2 + $0x10] sm:$0xf]
    %v110 = vld [vmem:[#allocation2 + $0x14] sm:$0xf]
    %v111 = vld [vmem:[#allocation2 + $0x18] sm:$0xf]
    %v112 = vld [vmem:[#allocation2 + $0x1c] sm:$0xf]
    %v113 = vld [vmem:[#allocation2 + $0x20] sm:$0xf]
    %v114 = vld [vmem:[#allocation2 + $0x24] sm:$0xf]
    %v115 = vld [vmem:[#allocation2 + $0x28] sm:$0xf]
    %v116 = vld [vmem:[#allocation2 + $0x2c] sm:$0xf]
    %v117 = vld [vmem:[#allocation2 + $0x30] sm:$0xf]
    %v118 = vld [vmem:[#allocation2 + $0x34] sm:$0xf]
    %v119 = vld [vmem:[#allocation2 + $0x38] sm:$0xf]
    %v120 = vld [vmem:[#allocation2 + $0x3c] sm:$0xf]
    %v121 = vld [vmem:[#allocation2 + $0x40] sm:$0xf]
    %v122 = vld [vmem:[#allocation2 + $0x44] sm:$0xf]
    %v123 = vld [vmem:[#allocation2 + $0x48] sm:$0xf]
    %v124 = vld [vmem:[#allocation2 + $0x4c] sm:$0xf]
    %v125 = vld [vmem:[#allocation2 + $0x50] sm:$0xf]
    %v126 = vld [vmem:[#allocation2 + $0x54] sm:$0xf]
    %v127 = vld [vmem:[#allocation2 + $0x58] sm:$0xf]
    %v128 = vld [vmem:[#allocation2 + $0x5c] sm:$0xf]
    %v129 = vld [vmem:[#allocation2 + $0x60] sm:$0xf]
    %v130 = vld [vmem:[#allocation2 + $0x64] sm:$0xf]
    %v131 = vld [vmem:[#allocation2 + $0x68] sm:$0xf]
    %v132 = vld [vmem:[#allocation2 + $0x6c] sm:$0xf]
    %v133 = vld [vmem:[#allocation2 + $0x70] sm:$0xf]
    %v134 = vld [vmem:[#allocation2 + $0x74] sm:$0xf]
    %v135 = vld [vmem:[#allocation2 + $0x78] sm:$0xf]
    %v136 = vld [vmem:[#allocation2 + $0x7c] sm:$0xf]
    %v137 = vld [vmem:[#allocation7] sm:$0xff]
    %v138 = vld [vmem:[#allocation7 + $0x8] sm:$0xff]
    %v139 = vld [vmem:[#allocation7 + $0x10] sm:$0xff]
    %v140 = vld [vmem:[#allocation7 + $0x18] sm:$0xff]
    %v141 = vld [vmem:[#allocation7 + $0x20] sm:$0xff]
    %v142 = vld [vmem:[#allocation7 + $0x28] sm:$0xff]
    %v143 = vld [vmem:[#allocation7 + $0x30] sm:$0xff]
    %v144 = vld [vmem:[#allocation7 + $0x38] sm:$0xff]
    %v145 = vld [vmem:[#allocation7 + $0x40] sm:$0xff]
    %v146 = vld [vmem:[#allocation7 + $0x48] sm:$0xff]
    %v147 = vld [vmem:[#allocation7 + $0x50] sm:$0xff]
    %v148 = vld [vmem:[#allocation7 + $0x58] sm:$0xff]
    %v149 = vld [vmem:[#allocation7 + $0x60] sm:$0xff]
    %v150 = vld [vmem:[#allocation7 + $0x68] sm:$0xff]
    %v151 = vld [vmem:[#allocation7 + $0x70] sm:$0xff]
    %v152 = vld [vmem:[#allocation7 + $0x78] sm:$0xff]
    %v185 = vunpack.c.l.b16 %v105
    %v186 = vunpack.c.l.b16 %v106
    %v187 = vunpack.c.l.b16 %v107
    %v188 = vunpack.c.l.b16 %v108
    %v189 = vunpack.c.l.b16 %v109
    %v190 = vunpack.c.l.b16 %v110
    %v191 = vunpack.c.l.b16 %v111
    %v192 = vunpack.c.l.b16 %v112
    %v193 = vunpack.c.l.b16 %v113
    %v194 = vunpack.c.l.b16 %v114
    %v195 = vunpack.c.l.b16 %v115
    %v196 = vunpack.c.l.b16 %v116
    %v197 = vunpack.c.l.b16 %v117
    %v198 = vunpack.c.l.b16 %v118
    %v199 = vunpack.c.l.b16 %v119
    %v200 = vunpack.c.l.b16 %v120
    %v201 = vunpack.c.l.b16 %v121
    %v202 = vunpack.c.l.b16 %v122
    %v203 = vunpack.c.l.b16 %v123
    %v204 = vunpack.c.l.b16 %v124
    %v205 = vunpack.c.l.b16 %v125
    %v206 = vunpack.c.l.b16 %v126
    %v207 = vunpack.c.l.b16 %v127
    %v208 = vunpack.c.l.b16 %v128
    %v209 = vunpack.c.l.b16 %v129
    %v210 = vunpack.c.l.b16 %v130
    %v211 = vunpack.c.l.b16 %v131
    %v212 = vunpack.c.l.b16 %v132
    %v213 = vunpack.c.l.b16 %v133
    %v214 = vunpack.c.l.b16 %v134
    %v215 = vunpack.c.l.b16 %v135
    %v216 = vunpack.c.l.b16 %v136
    %v217 = vpack.c.b16 %v186, %v185
    %v218 = vpack.c.b16 %v188, %v187
    %v219 = vpack.c.b16 %v190, %v189
    %v220 = vpack.c.b16 %v192, %v191
    %v221 = vpack.c.b16 %v194, %v193
    %v222 = vpack.c.b16 %v196, %v195
    %v223 = vpack.c.b16 %v198, %v197
    %v224 = vpack.c.b16 %v200, %v199
    %v225 = vpack.c.b16 %v202, %v201
    %v226 = vpack.c.b16 %v204, %v203
    %v227 = vpack.c.b16 %v206, %v205
    %v228 = vpack.c.b16 %v208, %v207
    %v229 = vpack.c.b16 %v210, %v209
    %v230 = vpack.c.b16 %v212, %v211
    %v231 = vpack.c.b16 %v214, %v213
    %v232 = vpack.c.b16 %v216, %v215
    %v265 = vunpack.c.l.b16 %v137
    %v266 = vunpack.c.h.b16 %v137
    %v267 = vunpack.c.l.b16 %v138
    %v268 = vunpack.c.h.b16 %v138
    %v269 = vunpack.c.l.b16 %v139
    %v270 = vunpack.c.h.b16 %v139
    %v271 = vunpack.c.l.b16 %v140
    %v272 = vunpack.c.h.b16 %v140
    %v273 = vunpack.c.l.b16 %v141
    %v274 = vunpack.c.h.b16 %v141
    %v275 = vunpack.c.l.b16 %v142
    %v276 = vunpack.c.h.b16 %v142
    %v277 = vunpack.c.l.b16 %v143
    %v278 = vunpack.c.h.b16 %v143
    %v279 = vunpack.c.l.b16 %v144
    %v280 = vunpack.c.h.b16 %v144
    %v281 = vunpack.c.l.b16 %v145
    %v282 = vunpack.c.h.b16 %v145
    %v283 = vunpack.c.l.b16 %v146
    %v284 = vunpack.c.h.b16 %v146
    %v285 = vunpack.c.l.b16 %v147
    %v286 = vunpack.c.h.b16 %v147
    %v287 = vunpack.c.l.b16 %v148
    %v288 = vunpack.c.h.b16 %v148
    %v289 = vunpack.c.l.b16 %v149
    %v290 = vunpack.c.h.b16 %v149
    %v291 = vunpack.c.l.b16 %v150
    %v292 = vunpack.c.h.b16 %v150
    %v293 = vunpack.c.l.b16 %v151
    %v294 = vunpack.c.h.b16 %v151
    %v295 = vunpack.c.l.b16 %v152
    %v296 = vunpack.c.h.b16 %v152
    %v297 = vpack.c.b16 %v267, %v265
    %v298 = vpack.c.b16 %v268, %v266
    %v299 = vpack.c.b16 %v271, %v269
    %v300 = vpack.c.b16 %v272, %v270
    %v301 = vpack.c.b16 %v275, %v273
    %v302 = vpack.c.b16 %v276, %v274
    %v303 = vpack.c.b16 %v279, %v277
    %v304 = vpack.c.b16 %v280, %v278
    %v305 = vpack.c.b16 %v283, %v281
    %v306 = vpack.c.b16 %v284, %v282
    %v307 = vpack.c.b16 %v287, %v285
    %v308 = vpack.c.b16 %v288, %v286
    %v309 = vpack.c.b16 %v291, %v289
    %v310 = vpack.c.b16 %v292, %v290
    %v311 = vpack.c.b16 %v295, %v293
    %v312 = vpack.c.b16 %v296, %v294
    %329 = vmatpush.bf16.msra.mxu0 %v311
    %330 = vmatpush.bf16.msra.mxu0 %v309
    %331 = vmatpush.bf16.msra.mxu0 %v307
    %332 = vmatpush.bf16.msra.mxu0 %v305
    %333 = vmatpush.bf16.msra.mxu0 %v303
    %334 = vmatpush.bf16.msra.mxu0 %v301
    %335 = vmatpush.bf16.msra.mxu0 %v299
    %336 = vmatpush.bf16.msra.mxu0 %v297
    %337 = vmatmul.bf16.gmra.mxu0 %v217
    %v338 = vpop.f32.mrf.mxu0
    %v339 = vadd.f32 0.0, %v338
    %v340 = vpop.f32.mrf.mxu0
    %v341 = vadd.f32 0.0, %v340
    %342 = vmatmul.bf16.gmra.mxu0 %v218
    %v343 = vpop.f32.mrf.mxu0
    %v344 = vadd.f32 0.0, %v343
    %v345 = vpop.f32.mrf.mxu0
    %v346 = vadd.f32 0.0, %v345
    %347 = vmatmul.bf16.gmra.mxu0 %v219
    %v348 = vpop.f32.mrf.mxu0
    %v349 = vadd.f32 0.0, %v348
    %v350 = vpop.f32.mrf.mxu0
    %v351 = vadd.f32 0.0, %v350
    %352 = vmatmul.bf16.gmra.mxu0 %v220
    %v353 = vpop.f32.mrf.mxu0
    %v354 = vadd.f32 0.0, %v353
    %v355 = vpop.f32.mrf.mxu0
    %v356 = vadd.f32 0.0, %v355
    %357 = vmatmul.bf16.gmra.mxu0 %v221
    %v358 = vpop.f32.mrf.mxu0
    %v359 = vadd.f32 0.0, %v358
    %v360 = vpop.f32.mrf.mxu0
    %v361 = vadd.f32 0.0, %v360
    %362 = vmatmul.bf16.gmra.mxu0 %v222
    %v363 = vpop.f32.mrf.mxu0
    %v364 = vadd.f32 0.0, %v363
    %v365 = vpop.f32.mrf.mxu0
    %v366 = vadd.f32 0.0, %v365
    %367 = vmatmul.bf16.gmra.mxu0 %v223
    %v368 = vpop.f32.mrf.mxu0
    %v369 = vadd.f32 0.0, %v368
    %v370 = vpop.f32.mrf.mxu0
    %v371 = vadd.f32 0.0, %v370
    %372 = vmatmul.bf16.gmra.mxu0 %v224
    %v373 = vpop.f32.mrf.mxu0
    %v374 = vadd.f32 0.0, %v373
    %v375 = vpop.f32.mrf.mxu0
    %v376 = vadd.f32 0.0, %v375
    %377 = vmatmul.bf16.gmra.mxu0 %v225
    %v378 = vpop.f32.mrf.mxu0
    %v379 = vadd.f32 0.0, %v378
    %v380 = vpop.f32.mrf.mxu0
    %v381 = vadd.f32 0.0, %v380
    %382 = vmatmul.bf16.gmra.mxu0 %v226
    %v383 = vpop.f32.mrf.mxu0
    %v384 = vadd.f32 0.0, %v383
    %v385 = vpop.f32.mrf.mxu0
    %v386 = vadd.f32 0.0, %v385
    %387 = vmatmul.bf16.gmra.mxu0 %v227
    %v388 = vpop.f32.mrf.mxu0
    %v389 = vadd.f32 0.0, %v388
    %v390 = vpop.f32.mrf.mxu0
    %v391 = vadd.f32 0.0, %v390
    %392 = vmatmul.bf16.gmra.mxu0 %v228
    %v393 = vpop.f32.mrf.mxu0
    %v394 = vadd.f32 0.0, %v393
    %v395 = vpop.f32.mrf.mxu0
    %v396 = vadd.f32 0.0, %v395
    %397 = vmatmul.bf16.gmra.mxu0 %v229
    %v398 = vpop.f32.mrf.mxu0
    %v399 = vadd.f32 0.0, %v398
    %v400 = vpop.f32.mrf.mxu0
    %v401 = vadd.f32 0.0, %v400
    %402 = vmatmul.bf16.gmra.mxu0 %v230
    %v403 = vpop.f32.mrf.mxu0
    %v404 = vadd.f32 0.0, %v403
    %v405 = vpop.f32.mrf.mxu0
    %v406 = vadd.f32 0.0, %v405
    %407 = vmatmul.bf16.gmra.mxu0 %v231
    %v408 = vpop.f32.mrf.mxu0
    %v409 = vadd.f32 0.0, %v408
    %v410 = vpop.f32.mrf.mxu0
    %v411 = vadd.f32 0.0, %v410
    %412 = vmatmul.bf16.gmra.mxu0 %v232
    %v413 = vpop.f32.mrf.mxu0
    %v414 = vadd.f32 0.0, %v413
    %v415 = vpop.f32.mrf.mxu0
    %v416 = vadd.f32 0.0, %v415
    %417 = vdwg.mxu0
    %418 = vmatpush.bf16.msra.mxu0 %v312
    %419 = vmatpush.bf16.msra.mxu0 %v310
    %420 = vmatpush.bf16.msra.mxu0 %v308
    %421 = vmatpush.bf16.msra.mxu0 %v306
    %422 = vmatpush.bf16.msra.mxu0 %v304
    %423 = vmatpush.bf16.msra.mxu0 %v302
    %424 = vmatpush.bf16.msra.mxu0 %v300
    %425 = vmatpush.bf16.msra.mxu0 %v298
    %426 = vmatmul.bf16.gmra.mxu0 %v217
    %v427 = vpop.f32.mrf.mxu0
    %v428 = vadd.f32 0.0, %v427
    %v429 = vpop.f32.mrf.mxu0
    %v430 = vadd.f32 0.0, %v429
    %431 = vmatmul.bf16.gmra.mxu0 %v218
    %v432 = vpop.f32.mrf.mxu0
    %v433 = vadd.f32 0.0, %v432
    %v434 = vpop.f32.mrf.mxu0
    %v435 = vadd.f32 0.0, %v434
    %436 = vmatmul.bf16.gmra.mxu0 %v219
    %v437 = vpop.f32.mrf.mxu0
    %v438 = vadd.f32 0.0, %v437
    %v439 = vpop.f32.mrf.mxu0
    %v440 = vadd.f32 0.0, %v439
    %441 = vmatmul.bf16.gmra.mxu0 %v220
    %v442 = vpop.f32.mrf.mxu0
    %v443 = vadd.f32 0.0, %v442
    %v444 = vpop.f32.mrf.mxu0
    %v445 = vadd.f32 0.0, %v444
    %446 = vmatmul.bf16.gmra.mxu0 %v221
    %v447 = vpop.f32.mrf.mxu0
    %v448 = vadd.f32 0.0, %v447
    %v449 = vpop.f32.mrf.mxu0
    %v450 = vadd.f32 0.0, %v449
    %451 = vmatmul.bf16.gmra.mxu0 %v222
    %v452 = vpop.f32.mrf.mxu0
    %v453 = vadd.f32 0.0, %v452
    %v454 = vpop.f32.mrf.mxu0
    %v455 = vadd.f32 0.0, %v454
    %456 = vmatmul.bf16.gmra.mxu0 %v223
    %v457 = vpop.f32.mrf.mxu0
    %v458 = vadd.f32 0.0, %v457
    %v459 = vpop.f32.mrf.mxu0
    %v460 = vadd.f32 0.0, %v459
    %461 = vmatmul.bf16.gmra.mxu0 %v224
    %v462 = vpop.f32.mrf.mxu0
    %v463 = vadd.f32 0.0, %v462
    %v464 = vpop.f32.mrf.mxu0
    %v465 = vadd.f32 0.0, %v464
    %466 = vmatmul.bf16.gmra.mxu0 %v225
    %v467 = vpop.f32.mrf.mxu0
    %v468 = vadd.f32 0.0, %v467
    %v469 = vpop.f32.mrf.mxu0
    %v470 = vadd.f32 0.0, %v469
    %471 = vmatmul.bf16.gmra.mxu0 %v226
    %v472 = vpop.f32.mrf.mxu0
    %v473 = vadd.f32 0.0, %v472
    %v474 = vpop.f32.mrf.mxu0
    %v475 = vadd.f32 0.0, %v474
    %476 = vmatmul.bf16.gmra.mxu0 %v227
    %v477 = vpop.f32.mrf.mxu0
    %v478 = vadd.f32 0.0, %v477
    %v479 = vpop.f32.mrf.mxu0
    %v480 = vadd.f32 0.0, %v479
    %481 = vmatmul.bf16.gmra.mxu0 %v228
    %v482 = vpop.f32.mrf.mxu0
    %v483 = vadd.f32 0.0, %v482
    %v484 = vpop.f32.mrf.mxu0
    %v485 = vadd.f32 0.0, %v484
    %486 = vmatmul.bf16.gmra.mxu0 %v229
    %v487 = vpop.f32.mrf.mxu0
    %v488 = vadd.f32 0.0, %v487
    %v489 = vpop.f32.mrf.mxu0
    %v490 = vadd.f32 0.0, %v489
    %491 = vmatmul.bf16.gmra.mxu0 %v230
    %v492 = vpop.f32.mrf.mxu0
    %v493 = vadd.f32 0.0, %v492
    %v494 = vpop.f32.mrf.mxu0
    %v495 = vadd.f32 0.0, %v494
    %496 = vmatmul.bf16.gmra.mxu0 %v231
    %v497 = vpop.f32.mrf.mxu0
    %v498 = vadd.f32 0.0, %v497
    %v499 = vpop.f32.mrf.mxu0
    %v500 = vadd.f32 0.0, %v499
    %501 = vmatmul.bf16.gmra.mxu0 %v232
    %v502 = vpop.f32.mrf.mxu0
    %v503 = vadd.f32 0.0, %v502
    %v504 = vpop.f32.mrf.mxu0
    %v505 = vadd.f32 0.0, %v504
    %506 = vdwg.mxu0
    %v507 = vpack.c.bf16 %v428, %v339
    %v508 = vpack.c.bf16 %v430, %v341
    %v509 = vpack.c.bf16 %v433, %v344
    %v510 = vpack.c.bf16 %v435, %v346
    %v511 = vpack.c.bf16 %v438, %v349
    %v512 = vpack.c.bf16 %v440, %v351
    %v513 = vpack.c.bf16 %v443, %v354
    %v514 = vpack.c.bf16 %v445, %v356
    %v515 = vpack.c.bf16 %v448, %v359
    %v516 = vpack.c.bf16 %v450, %v361
    %v517 = vpack.c.bf16 %v453, %v364
    %v518 = vpack.c.bf16 %v455, %v366
    %v519 = vpack.c.bf16 %v458, %v369
    %v520 = vpack.c.bf16 %v460, %v371
    %v521 = vpack.c.bf16 %v463, %v374
    %v522 = vpack.c.bf16 %v465, %v376
    %v523 = vpack.c.bf16 %v468, %v379
    %v524 = vpack.c.bf16 %v470, %v381
    %v525 = vpack.c.bf16 %v473, %v384
    %v526 = vpack.c.bf16 %v475, %v386
    %v527 = vpack.c.bf16 %v478, %v389
    %v528 = vpack.c.bf16 %v480, %v391
    %v529 = vpack.c.bf16 %v483, %v394
    %v530 = vpack.c.bf16 %v485, %v396
    %v531 = vpack.c.bf16 %v488, %v399
    %v532 = vpack.c.bf16 %v490, %v401
    %v533 = vpack.c.bf16 %v493, %v404
    %v534 = vpack.c.bf16 %v495, %v406
    %v535 = vpack.c.bf16 %v498, %v409
    %v536 = vpack.c.bf16 %v500, %v411
    %v537 = vpack.c.bf16 %v503, %v414
    %v538 = vpack.c.bf16 %v505, %v416
    %v539 = vld [vmem:[#allocation5] sm:$0xff]
    %v540 = vld [vmem:[#allocation5 + $0x10] sm:$0xff]
    %v541 = vld [vmem:[#allocation5 + $0x20] sm:$0xff]
    %v542 = vld [vmem:[#allocation5 + $0x30] sm:$0xff]
    %v543 = vld [vmem:[#allocation5 + $0x40] sm:$0xff]
    %v544 = vld [vmem:[#allocation5 + $0x50] sm:$0xff]
    %v545 = vld [vmem:[#allocation5 + $0x60] sm:$0xff]
    %v546 = vld [vmem:[#allocation5 + $0x70] sm:$0xff]
    %v547 = vld [vmem:[#allocation5 + $0x80] sm:$0xff]
    %v548 = vld [vmem:[#allocation5 + $0x90] sm:$0xff]
    %v549 = vld [vmem:[#allocation5 + $0xa0] sm:$0xff]
    %v550 = vld [vmem:[#allocation5 + $0xb0] sm:$0xff]
    %v551 = vld [vmem:[#allocation5 + $0xc0] sm:$0xff]
    %v552 = vld [vmem:[#allocation5 + $0xd0] sm:$0xff]
    %v553 = vld [vmem:[#allocation5 + $0xe0] sm:$0xff]
    %v554 = vld [vmem:[#allocation5 + $0xf0] sm:$0xff]
    %v555 = vld [vmem:[#allocation5 + $0x100] sm:$0xff]
    %v556 = vld [vmem:[#allocation5 + $0x110] sm:$0xff]
    %v557 = vld [vmem:[#allocation5 + $0x120] sm:$0xff]
    %v558 = vld [vmem:[#allocation5 + $0x130] sm:$0xff]
    %v559 = vld [vmem:[#allocation5 + $0x140] sm:$0xff]
    %v560 = vld [vmem:[#allocation5 + $0x150] sm:$0xff]
    %v561 = vld [vmem:[#allocation5 + $0x160] sm:$0xff]
    %v562 = vld [vmem:[#allocation5 + $0x170] sm:$0xff]
    %v563 = vld [vmem:[#allocation5 + $0x180] sm:$0xff]
    %v564 = vld [vmem:[#allocation5 + $0x190] sm:$0xff]
    %v565 = vld [vmem:[#allocation5 + $0x1a0] sm:$0xff]
    %v566 = vld [vmem:[#allocation5 + $0x1b0] sm:$0xff]
    %v567 = vld [vmem:[#allocation5 + $0x1c0] sm:$0xff]
    %v568 = vld [vmem:[#allocation5 + $0x1d0] sm:$0xff]
    %v569 = vld [vmem:[#allocation5 + $0x1e0] sm:$0xff]
    %v570 = vld [vmem:[#allocation5 + $0x1f0] sm:$0xff]
    %v571 = vld [vmem:[#allocation5 + $0x8] sm:$0xff]
    %v572 = vld [vmem:[#allocation5 + $0x18] sm:$0xff]
    %v573 = vld [vmem:[#allocation5 + $0x28] sm:$0xff]
    %v574 = vld [vmem:[#allocation5 + $0x38] sm:$0xff]
    %v575 = vld [vmem:[#allocation5 + $0x48] sm:$0xff]
    %v576 = vld [vmem:[#allocation5 + $0x58] sm:$0xff]
    %v577 = vld [vmem:[#allocation5 + $0x68] sm:$0xff]
    %v578 = vld [vmem:[#allocation5 + $0x78] sm:$0xff]
    %v579 = vld [vmem:[#allocation5 + $0x88] sm:$0xff]
    %v580 = vld [vmem:[#allocation5 + $0x98] sm:$0xff]
    %v581 = vld [vmem:[#allocation5 + $0xa8] sm:$0xff]
    %v582 = vld [vmem:[#allocation5 + $0xb8] sm:$0xff]
    %v583 = vld [vmem:[#allocation5 + $0xc8] sm:$0xff]
    %v584 = vld [vmem:[#allocation5 + $0xd8] sm:$0xff]
    %v585 = vld [vmem:[#allocation5 + $0xe8] sm:$0xff]
    %v586 = vld [vmem:[#allocation5 + $0xf8] sm:$0xff]
    %v587 = vld [vmem:[#allocation5 + $0x108] sm:$0xff]
    %v588 = vld [vmem:[#allocation5 + $0x118] sm:$0xff]
    %v589 = vld [vmem:[#allocation5 + $0x128] sm:$0xff]
    %v590 = vld [vmem:[#allocation5 + $0x138] sm:$0xff]
    %v591 = vld [vmem:[#allocation5 + $0x148] sm:$0xff]
    %v592 = vld [vmem:[#allocation5 + $0x158] sm:$0xff]
    %v593 = vld [vmem:[#allocation5 + $0x168] sm:$0xff]
    %v594 = vld [vmem:[#allocation5 + $0x178] sm:$0xff]
    %v595 = vld [vmem:[#allocation5 + $0x188] sm:$0xff]
    %v596 = vld [vmem:[#allocation5 + $0x198] sm:$0xff]
    %v597 = vld [vmem:[#allocation5 + $0x1a8] sm:$0xff]
    %v598 = vld [vmem:[#allocation5 + $0x1b8] sm:$0xff]
    %v599 = vld [vmem:[#allocation5 + $0x1c8] sm:$0xff]
    %v600 = vld [vmem:[#allocation5 + $0x1d8] sm:$0xff]
    %v601 = vld [vmem:[#allocation5 + $0x1e8] sm:$0xff]
    %v602 = vld [vmem:[#allocation5 + $0x1f8] sm:$0xff]
    %v635 = vunpack.c.l.b16 %v571
    %v636 = vunpack.c.h.b16 %v571
    %v637 = vunpack.c.l.b16 %v572
    %v638 = vunpack.c.h.b16 %v572
    %v639 = vunpack.c.l.b16 %v573
    %v640 = vunpack.c.h.b16 %v573
    %v641 = vunpack.c.l.b16 %v574
    %v642 = vunpack.c.h.b16 %v574
    %v643 = vunpack.c.l.b16 %v575
    %v644 = vunpack.c.h.b16 %v575
    %v645 = vunpack.c.l.b16 %v576
    %v646 = vunpack.c.h.b16 %v576
    %v647 = vunpack.c.l.b16 %v577
    %v648 = vunpack.c.h.b16 %v577
    %v649 = vunpack.c.l.b16 %v578
    %v650 = vunpack.c.h.b16 %v578
    %v651 = vunpack.c.l.b16 %v579
    %v652 = vunpack.c.h.b16 %v579
    %v653 = vunpack.c.l.b16 %v580
    %v654 = vunpack.c.h.b16 %v580
    %v655 = vunpack.c.l.b16 %v581
    %v656 = vunpack.c.h.b16 %v581
    %v657 = vunpack.c.l.b16 %v582
    %v658 = vunpack.c.h.b16 %v582
    %v659 = vunpack.c.l.b16 %v583
    %v660 = vunpack.c.h.b16 %v583
    %v661 = vunpack.c.l.b16 %v584
    %v662 = vunpack.c.h.b16 %v584
    %v663 = vunpack.c.l.b16 %v585
    %v664 = vunpack.c.h.b16 %v585
    %v665 = vunpack.c.l.b16 %v586
    %v666 = vunpack.c.h.b16 %v586
    %v667 = vunpack.c.l.b16 %v587
    %v668 = vunpack.c.h.b16 %v587
    %v669 = vunpack.c.l.b16 %v588
    %v670 = vunpack.c.h.b16 %v588
    %v671 = vunpack.c.l.b16 %v589
    %v672 = vunpack.c.h.b16 %v589
    %v673 = vunpack.c.l.b16 %v590
    %v674 = vunpack.c.h.b16 %v590
    %v675 = vunpack.c.l.b16 %v591
    %v676 = vunpack.c.h.b16 %v591
    %v677 = vunpack.c.l.b16 %v592
    %v678 = vunpack.c.h.b16 %v592
    %v679 = vunpack.c.l.b16 %v593
    %v680 = vunpack.c.h.b16 %v593
    %v681 = vunpack.c.l.b16 %v594
    %v682 = vunpack.c.h.b16 %v594
    %v683 = vunpack.c.l.b16 %v595
    %v684 = vunpack.c.h.b16 %v595
    %v685 = vunpack.c.l.b16 %v596
    %v686 = vunpack.c.h.b16 %v596
    %v687 = vunpack.c.l.b16 %v597
    %v688 = vunpack.c.h.b16 %v597
    %v689 = vunpack.c.l.b16 %v598
    %v690 = vunpack.c.h.b16 %v598
    %v691 = vunpack.c.l.b16 %v599
    %v692 = vunpack.c.h.b16 %v599
    %v693 = vunpack.c.l.b16 %v600
    %v694 = vunpack.c.h.b16 %v600
    %v695 = vunpack.c.l.b16 %v601
    %v696 = vunpack.c.h.b16 %v601
    %v697 = vunpack.c.l.b16 %v602
    %v698 = vunpack.c.h.b16 %v602
    %v699 = vpack.c.b16 %v637, %v635
    %v700 = vpack.c.b16 %v638, %v636
    %v701 = vpack.c.b16 %v641, %v639
    %v702 = vpack.c.b16 %v642, %v640
    %v703 = vpack.c.b16 %v645, %v643
    %v704 = vpack.c.b16 %v646, %v644
    %v705 = vpack.c.b16 %v649, %v647
    %v706 = vpack.c.b16 %v650, %v648
    %v707 = vpack.c.b16 %v653, %v651
    %v708 = vpack.c.b16 %v654, %v652
    %v709 = vpack.c.b16 %v657, %v655
    %v710 = vpack.c.b16 %v658, %v656
    %v711 = vpack.c.b16 %v661, %v659
    %v712 = vpack.c.b16 %v662, %v660
    %v713 = vpack.c.b16 %v665, %v663
    %v714 = vpack.c.b16 %v666, %v664
    %v715 = vpack.c.b16 %v669, %v667
    %v716 = vpack.c.b16 %v670, %v668
    %v717 = vpack.c.b16 %v673, %v671
    %v718 = vpack.c.b16 %v674, %v672
    %v719 = vpack.c.b16 %v677, %v675
    %v720 = vpack.c.b16 %v678, %v676
    %v721 = vpack.c.b16 %v681, %v679
    %v722 = vpack.c.b16 %v682, %v680
    %v723 = vpack.c.b16 %v685, %v683
    %v724 = vpack.c.b16 %v686, %v684
    %v725 = vpack.c.b16 %v689, %v687
    %v726 = vpack.c.b16 %v690, %v688
    %v727 = vpack.c.b16 %v693, %v691
    %v728 = vpack.c.b16 %v694, %v692
    %v729 = vpack.c.b16 %v697, %v695
    %v730 = vpack.c.b16 %v698, %v696
    %v795 = vunpack.c.h.b16 %v507
    %v796 = vunpack.c.h.b16 %v508
    %v797 = vunpack.c.h.b16 %v509
    %v798 = vunpack.c.h.b16 %v510
    %v799 = vunpack.c.h.b16 %v511
    %v800 = vunpack.c.h.b16 %v512
    %v801 = vunpack.c.h.b16 %v513
    %v802 = vunpack.c.h.b16 %v514
    %v803 = vunpack.c.h.b16 %v515
    %v804 = vunpack.c.h.b16 %v516
    %v805 = vunpack.c.h.b16 %v517
    %v806 = vunpack.c.h.b16 %v518
    %v807 = vunpack.c.h.b16 %v519
    %v808 = vunpack.c.h.b16 %v520
    %v809 = vunpack.c.h.b16 %v521
    %v810 = vunpack.c.h.b16 %v522
    %v811 = vunpack.c.h.b16 %v523
    %v812 = vunpack.c.h.b16 %v524
    %v813 = vunpack.c.h.b16 %v525
    %v814 = vunpack.c.h.b16 %v526
    %v815 = vunpack.c.h.b16 %v527
    %v816 = vunpack.c.h.b16 %v528
    %v817 = vunpack.c.h.b16 %v529
    %v818 = vunpack.c.h.b16 %v530
    %v819 = vunpack.c.h.b16 %v531
    %v820 = vunpack.c.h.b16 %v532
    %v821 = vunpack.c.h.b16 %v533
    %v822 = vunpack.c.h.b16 %v534
    %v823 = vunpack.c.h.b16 %v535
    %v824 = vunpack.c.h.b16 %v536
    %v825 = vunpack.c.h.b16 %v537
    %v826 = vunpack.c.h.b16 %v538
    %v827 = vpack.c.b16 %v796, %v795
    %v828 = vpack.c.b16 %v798, %v797
    %v829 = vpack.c.b16 %v800, %v799
    %v830 = vpack.c.b16 %v802, %v801
    %v831 = vpack.c.b16 %v804, %v803
    %v832 = vpack.c.b16 %v806, %v805
    %v833 = vpack.c.b16 %v808, %v807
    %v834 = vpack.c.b16 %v810, %v809
    %v835 = vpack.c.b16 %v812, %v811
    %v836 = vpack.c.b16 %v814, %v813
    %v837 = vpack.c.b16 %v816, %v815
    %v838 = vpack.c.b16 %v818, %v817
    %v839 = vpack.c.b16 %v820, %v819
    %v840 = vpack.c.b16 %v822, %v821
    %v841 = vpack.c.b16 %v824, %v823
    %v842 = vpack.c.b16 %v826, %v825
    %859 = vmatpush.bf16.msra.mxu0 %v834
    %860 = vmatpush.bf16.msra.mxu0 %v833
    %861 = vmatpush.bf16.msra.mxu0 %v832
    %862 = vmatpush.bf16.msra.mxu0 %v831
    %863 = vmatpush.bf16.msra.mxu0 %v830
    %864 = vmatpush.bf16.msra.mxu0 %v829
    %865 = vmatpush.bf16.msra.mxu0 %v828
    %866 = vmatpush.bf16.msra.mxu0 %v827
    %867 = vmatmul.bf16.gmra.mxu0 %v699
    %v868 = vpop.f32.mrf.mxu0
    %v869 = vadd.f32 0.0, %v868
    %v870 = vpop.f32.mrf.mxu0
    %v871 = vadd.f32 0.0, %v870
    %872 = vmatmul.bf16.gmra.mxu0 %v701
    %v873 = vpop.f32.mrf.mxu0
    %v874 = vadd.f32 0.0, %v873
    %v875 = vpop.f32.mrf.mxu0
    %v876 = vadd.f32 0.0, %v875
    %877 = vmatmul.bf16.gmra.mxu0 %v703
    %v878 = vpop.f32.mrf.mxu0
    %v879 = vadd.f32 0.0, %v878
    %v880 = vpop.f32.mrf.mxu0
    %v881 = vadd.f32 0.0, %v880
    %882 = vmatmul.bf16.gmra.mxu0 %v705
    %v883 = vpop.f32.mrf.mxu0
    %v884 = vadd.f32 0.0, %v883
    %v885 = vpop.f32.mrf.mxu0
    %v886 = vadd.f32 0.0, %v885
    %887 = vmatmul.bf16.gmra.mxu0 %v707
    %v888 = vpop.f32.mrf.mxu0
    %v889 = vadd.f32 0.0, %v888
    %v890 = vpop.f32.mrf.mxu0
    %v891 = vadd.f32 0.0, %v890
    %892 = vmatmul.bf16.gmra.mxu0 %v709
    %v893 = vpop.f32.mrf.mxu0
    %v894 = vadd.f32 0.0, %v893
    %v895 = vpop.f32.mrf.mxu0
    %v896 = vadd.f32 0.0, %v895
    %897 = vmatmul.bf16.gmra.mxu0 %v711
    %v898 = vpop.f32.mrf.mxu0
    %v899 = vadd.f32 0.0, %v898
    %v900 = vpop.f32.mrf.mxu0
    %v901 = vadd.f32 0.0, %v900
    %902 = vmatmul.bf16.gmra.mxu0 %v713
    %v903 = vpop.f32.mrf.mxu0
    %v904 = vadd.f32 0.0, %v903
    %v905 = vpop.f32.mrf.mxu0
    %v906 = vadd.f32 0.0, %v905
    %907 = vmatmul.bf16.gmra.mxu0 %v715
    %v908 = vpop.f32.mrf.mxu0
    %v909 = vadd.f32 0.0, %v908
    %v910 = vpop.f32.mrf.mxu0
    %v911 = vadd.f32 0.0, %v910
    %912 = vmatmul.bf16.gmra.mxu0 %v717
    %v913 = vpop.f32.mrf.mxu0
    %v914 = vadd.f32 0.0, %v913
    %v915 = vpop.f32.mrf.mxu0
    %v916 = vadd.f32 0.0, %v915
    %917 = vmatmul.bf16.gmra.mxu0 %v719
    %v918 = vpop.f32.mrf.mxu0
    %v919 = vadd.f32 0.0, %v918
    %v920 = vpop.f32.mrf.mxu0
    %v921 = vadd.f32 0.0, %v920
    %922 = vmatmul.bf16.gmra.mxu0 %v721
    %v923 = vpop.f32.mrf.mxu0
    %v924 = vadd.f32 0.0, %v923
    %v925 = vpop.f32.mrf.mxu0
    %v926 = vadd.f32 0.0, %v925
    %927 = vmatmul.bf16.gmra.mxu0 %v723
    %v928 = vpop.f32.mrf.mxu0
    %v929 = vadd.f32 0.0, %v928
    %v930 = vpop.f32.mrf.mxu0
    %v931 = vadd.f32 0.0, %v930
    %932 = vmatmul.bf16.gmra.mxu0 %v725
    %v933 = vpop.f32.mrf.mxu0
    %v934 = vadd.f32 0.0, %v933
    %v935 = vpop.f32.mrf.mxu0
    %v936 = vadd.f32 0.0, %v935
    %937 = vmatmul.bf16.gmra.mxu0 %v727
    %v938 = vpop.f32.mrf.mxu0
    %v939 = vadd.f32 0.0, %v938
    %v940 = vpop.f32.mrf.mxu0
    %v941 = vadd.f32 0.0, %v940
    %942 = vmatmul.bf16.gmra.mxu0 %v729
    %v943 = vpop.f32.mrf.mxu0
    %v944 = vadd.f32 0.0, %v943
    %v945 = vpop.f32.mrf.mxu0
    %v946 = vadd.f32 0.0, %v945
    %947 = vdwg.mxu0
    %948 = vmatpush.bf16.msra.mxu0 %v842
    %949 = vmatpush.bf16.msra.mxu0 %v841
    %950 = vmatpush.bf16.msra.mxu0 %v840
    %951 = vmatpush.bf16.msra.mxu0 %v839
    %952 = vmatpush.bf16.msra.mxu0 %v838
    %953 = vmatpush.bf16.msra.mxu0 %v837
    %954 = vmatpush.bf16.msra.mxu0 %v836
    %955 = vmatpush.bf16.msra.mxu0 %v835
    %956 = vmatmul.bf16.gmra.mxu0 %v700
    %v957 = vpop.f32.mrf.mxu0
    %v958 = vadd.f32 %v869, %v957
    %v959 = vpop.f32.mrf.mxu0
    %v960 = vadd.f32 %v871, %v959
    %961 = vmatmul.bf16.gmra.mxu0 %v702
    %v962 = vpop.f32.mrf.mxu0
    %v963 = vadd.f32 %v874, %v962
    %v964 = vpop.f32.mrf.mxu0
    %v965 = vadd.f32 %v876, %v964
    %966 = vmatmul.bf16.gmra.mxu0 %v704
    %v967 = vpop.f32.mrf.mxu0
    %v968 = vadd.f32 %v879, %v967
    %v969 = vpop.f32.mrf.mxu0
    %v970 = vadd.f32 %v881, %v969
    %971 = vmatmul.bf16.gmra.mxu0 %v706
    %v972 = vpop.f32.mrf.mxu0
    %v973 = vadd.f32 %v884, %v972
    %v974 = vpop.f32.mrf.mxu0
    %v975 = vadd.f32 %v886, %v974
    %976 = vmatmul.bf16.gmra.mxu0 %v708
    %v977 = vpop.f32.mrf.mxu0
    %v978 = vadd.f32 %v889, %v977
    %v979 = vpop.f32.mrf.mxu0
    %v980 = vadd.f32 %v891, %v979
    %981 = vmatmul.bf16.gmra.mxu0 %v710
    %v982 = vpop.f32.mrf.mxu0
    %v983 = vadd.f32 %v894, %v982
    %v984 = vpop.f32.mrf.mxu0
    %v985 = vadd.f32 %v896, %v984
    %986 = vmatmul.bf16.gmra.mxu0 %v712
    %v987 = vpop.f32.mrf.mxu0
    %v988 = vadd.f32 %v899, %v987
    %v989 = vpop.f32.mrf.mxu0
    %v990 = vadd.f32 %v901, %v989
    %991 = vmatmul.bf16.gmra.mxu0 %v714
    %v992 = vpop.f32.mrf.mxu0
    %v993 = vadd.f32 %v904, %v992
    %v994 = vpop.f32.mrf.mxu0
    %v995 = vadd.f32 %v906, %v994
    %996 = vmatmul.bf16.gmra.mxu0 %v716
    %v997 = vpop.f32.mrf.mxu0
    %v998 = vadd.f32 %v909, %v997
    %v999 = vpop.f32.mrf.mxu0
    %v1000 = vadd.f32 %v911, %v999
    %1001 = vmatmul.bf16.gmra.mxu0 %v718
    %v1002 = vpop.f32.mrf.mxu0
    %v1003 = vadd.f32 %v914, %v1002
    %v1004 = vpop.f32.mrf.mxu0
    %v1005 = vadd.f32 %v916, %v1004
    %1006 = vmatmul.bf16.gmra.mxu0 %v720
    %v1007 = vpop.f32.mrf.mxu0
    %v1008 = vadd.f32 %v919, %v1007
    %v1009 = vpop.f32.mrf.mxu0
    %v1010 = vadd.f32 %v921, %v1009
    %1011 = vmatmul.bf16.gmra.mxu0 %v722
    %v1012 = vpop.f32.mrf.mxu0
    %v1013 = vadd.f32 %v924, %v1012
    %v1014 = vpop.f32.mrf.mxu0
    %v1015 = vadd.f32 %v926, %v1014
    %1016 = vmatmul.bf16.gmra.mxu0 %v724
    %v1017 = vpop.f32.mrf.mxu0
    %v1018 = vadd.f32 %v929, %v1017
    %v1019 = vpop.f32.mrf.mxu0
    %v1020 = vadd.f32 %v931, %v1019
    %1021 = vmatmul.bf16.gmra.mxu0 %v726
    %v1022 = vpop.f32.mrf.mxu0
    %v1023 = vadd.f32 %v934, %v1022
    %v1024 = vpop.f32.mrf.mxu0
    %v1025 = vadd.f32 %v936, %v1024
    %1026 = vmatmul.bf16.gmra.mxu0 %v728
    %v1027 = vpop.f32.mrf.mxu0
    %v1028 = vadd.f32 %v939, %v1027
    %v1029 = vpop.f32.mrf.mxu0
    %v1030 = vadd.f32 %v941, %v1029
    %1031 = vmatmul.bf16.gmra.mxu0 %v730
    %v1032 = vpop.f32.mrf.mxu0
    %v1033 = vadd.f32 %v944, %v1032
    %v1034 = vpop.f32.mrf.mxu0
    %v1035 = vadd.f32 %v946, %v1034
    %1036 = vdwg.mxu0
    %v1069 = vunpack.c.l.b16 %v539
    %v1070 = vunpack.c.h.b16 %v539
    %v1071 = vunpack.c.l.b16 %v540
    %v1072 = vunpack.c.h.b16 %v540
    %v1073 = vunpack.c.l.b16 %v541
    %v1074 = vunpack.c.h.b16 %v541
    %v1075 = vunpack.c.l.b16 %v542
    %v1076 = vunpack.c.h.b16 %v542
    %v1077 = vunpack.c.l.b16 %v543
    %v1078 = vunpack.c.h.b16 %v543
    %v1079 = vunpack.c.l.b16 %v544
    %v1080 = vunpack.c.h.b16 %v544
    %v1081 = vunpack.c.l.b16 %v545
    %v1082 = vunpack.c.h.b16 %v545
    %v1083 = vunpack.c.l.b16 %v546
    %v1084 = vunpack.c.h.b16 %v546
    %v1085 = vunpack.c.l.b16 %v547
    %v1086 = vunpack.c.h.b16 %v547
    %v1087 = vunpack.c.l.b16 %v548
    %v1088 = vunpack.c.h.b16 %v548
    %v1089 = vunpack.c.l.b16 %v549
    %v1090 = vunpack.c.h.b16 %v549
    %v1091 = vunpack.c.l.b16 %v550
    %v1092 = vunpack.c.h.b16 %v550
    %v1093 = vunpack.c.l.b16 %v551
    %v1094 = vunpack.c.h.b16 %v551
    %v1095 = vunpack.c.l.b16 %v552
    %v1096 = vunpack.c.h.b16 %v552
    %v1097 = vunpack.c.l.b16 %v553
    %v1098 = vunpack.c.h.b16 %v553
    %v1099 = vunpack.c.l.b16 %v554
    %v1100 = vunpack.c.h.b16 %v554
    %v1101 = vunpack.c.l.b16 %v555
    %v1102 = vunpack.c.h.b16 %v555
    %v1103 = vunpack.c.l.b16 %v556
    %v1104 = vunpack.c.h.b16 %v556
    %v1105 = vunpack.c.l.b16 %v557
    %v1106 = vunpack.c.h.b16 %v557
    %v1107 = vunpack.c.l.b16 %v558
    %v1108 = vunpack.c.h.b16 %v558
    %v1109 = vunpack.c.l.b16 %v559
    %v1110 = vunpack.c.h.b16 %v559
    %v1111 = vunpack.c.l.b16 %v560
    %v1112 = vunpack.c.h.b16 %v560
    %v1113 = vunpack.c.l.b16 %v561
    %v1114 = vunpack.c.h.b16 %v561
    %v1115 = vunpack.c.l.b16 %v562
    %v1116 = vunpack.c.h.b16 %v562
    %v1117 = vunpack.c.l.b16 %v563
    %v1118 = vunpack.c.h.b16 %v563
    %v1119 = vunpack.c.l.b16 %v564
    %v1120 = vunpack.c.h.b16 %v564
    %v1121 = vunpack.c.l.b16 %v565
    %v1122 = vunpack.c.h.b16 %v565
    %v1123 = vunpack.c.l.b16 %v566
    %v1124 = vunpack.c.h.b16 %v566
    %v1125 = vunpack.c.l.b16 %v567
    %v1126 = vunpack.c.h.b16 %v567
    %v1127 = vunpack.c.l.b16 %v568
    %v1128 = vunpack.c.h.b16 %v568
    %v1129 = vunpack.c.l.b16 %v569
    %v1130 = vunpack.c.h.b16 %v569
    %v1131 = vunpack.c.l.b16 %v570
    %v1132 = vunpack.c.h.b16 %v570
    %v1133 = vpack.c.b16 %v1071, %v1069
    %v1134 = vpack.c.b16 %v1072, %v1070
    %v1135 = vpack.c.b16 %v1075, %v1073
    %v1136 = vpack.c.b16 %v1076, %v1074
    %v1137 = vpack.c.b16 %v1079, %v1077
    %v1138 = vpack.c.b16 %v1080, %v1078
    %v1139 = vpack.c.b16 %v1083, %v1081
    %v1140 = vpack.c.b16 %v1084, %v1082
    %v1141 = vpack.c.b16 %v1087, %v1085
    %v1142 = vpack.c.b16 %v1088, %v1086
    %v1143 = vpack.c.b16 %v1091, %v1089
    %v1144 = vpack.c.b16 %v1092, %v1090
    %v1145 = vpack.c.b16 %v1095, %v1093
    %v1146 = vpack.c.b16 %v1096, %v1094
    %v1147 = vpack.c.b16 %v1099, %v1097
    %v1148 = vpack.c.b16 %v1100, %v1098
    %v1149 = vpack.c.b16 %v1103, %v1101
    %v1150 = vpack.c.b16 %v1104, %v1102
    %v1151 = vpack.c.b16 %v1107, %v1105
    %v1152 = vpack.c.b16 %v1108, %v1106
    %v1153 = vpack.c.b16 %v1111, %v1109
    %v1154 = vpack.c.b16 %v1112, %v1110
    %v1155 = vpack.c.b16 %v1115, %v1113
    %v1156 = vpack.c.b16 %v1116, %v1114
    %v1157 = vpack.c.b16 %v1119, %v1117
    %v1158 = vpack.c.b16 %v1120, %v1118
    %v1159 = vpack.c.b16 %v1123, %v1121
    %v1160 = vpack.c.b16 %v1124, %v1122
    %v1161 = vpack.c.b16 %v1127, %v1125
    %v1162 = vpack.c.b16 %v1128, %v1126
    %v1163 = vpack.c.b16 %v1131, %v1129
    %v1164 = vpack.c.b16 %v1132, %v1130
    %v1197 = vunpack.c.l.b16 %v507
    %v1198 = vunpack.c.l.b16 %v508
    %v1199 = vunpack.c.l.b16 %v509
    %v1200 = vunpack.c.l.b16 %v510
    %v1201 = vunpack.c.l.b16 %v511
    %v1202 = vunpack.c.l.b16 %v512
    %v1203 = vunpack.c.l.b16 %v513
    %v1204 = vunpack.c.l.b16 %v514
    %v1205 = vunpack.c.l.b16 %v515
    %v1206 = vunpack.c.l.b16 %v516
    %v1207 = vunpack.c.l.b16 %v517
    %v1208 = vunpack.c.l.b16 %v518
    %v1209 = vunpack.c.l.b16 %v519
    %v1210 = vunpack.c.l.b16 %v520
    %v1211 = vunpack.c.l.b16 %v521
    %v1212 = vunpack.c.l.b16 %v522
    %v1213 = vunpack.c.l.b16 %v523
    %v1214 = vunpack.c.l.b16 %v524
    %v1215 = vunpack.c.l.b16 %v525
    %v1216 = vunpack.c.l.b16 %v526
    %v1217 = vunpack.c.l.b16 %v527
    %v1218 = vunpack.c.l.b16 %v528
    %v1219 = vunpack.c.l.b16 %v529
    %v1220 = vunpack.c.l.b16 %v530
    %v1221 = vunpack.c.l.b16 %v531
    %v1222 = vunpack.c.l.b16 %v532
    %v1223 = vunpack.c.l.b16 %v533
    %v1224 = vunpack.c.l.b16 %v534
    %v1225 = vunpack.c.l.b16 %v535
    %v1226 = vunpack.c.l.b16 %v536
    %v1227 = vunpack.c.l.b16 %v537
    %v1228 = vunpack.c.l.b16 %v538
    %v1229 = vpack.c.b16 %v1198, %v1197
    %v1230 = vpack.c.b16 %v1200, %v1199
    %v1231 = vpack.c.b16 %v1202, %v1201
    %v1232 = vpack.c.b16 %v1204, %v1203
    %v1233 = vpack.c.b16 %v1206, %v1205
    %v1234 = vpack.c.b16 %v1208, %v1207
    %v1235 = vpack.c.b16 %v1210, %v1209
    %v1236 = vpack.c.b16 %v1212, %v1211
    %v1237 = vpack.c.b16 %v1214, %v1213
    %v1238 = vpack.c.b16 %v1216, %v1215
    %v1239 = vpack.c.b16 %v1218, %v1217
    %v1240 = vpack.c.b16 %v1220, %v1219
    %v1241 = vpack.c.b16 %v1222, %v1221
    %v1242 = vpack.c.b16 %v1224, %v1223
    %v1243 = vpack.c.b16 %v1226, %v1225
    %v1244 = vpack.c.b16 %v1228, %v1227
    %1261 = vmatpush.bf16.msra.mxu0 %v1236
    %1262 = vmatpush.bf16.msra.mxu0 %v1235
    %1263 = vmatpush.bf16.msra.mxu0 %v1234
    %1264 = vmatpush.bf16.msra.mxu0 %v1233
    %1265 = vmatpush.bf16.msra.mxu0 %v1232
    %1266 = vmatpush.bf16.msra.mxu0 %v1231
    %1267 = vmatpush.bf16.msra.mxu0 %v1230
    %1268 = vmatpush.bf16.msra.mxu0 %v1229
    %1269 = vmatmul.bf16.gmra.mxu0 %v1133
    %v1270 = vpop.f32.mrf.mxu0
    %v1271 = vadd.f32 %v958, %v1270
    %v1272 = vpop.f32.mrf.mxu0
    %v1273 = vadd.f32 %v960, %v1272
    %1274 = vmatmul.bf16.gmra.mxu0 %v1135
    %v1275 = vpop.f32.mrf.mxu0
    %v1276 = vadd.f32 %v963, %v1275
    %v1277 = vpop.f32.mrf.mxu0
    %v1278 = vadd.f32 %v965, %v1277
    %1279 = vmatmul.bf16.gmra.mxu0 %v1137
    %v1280 = vpop.f32.mrf.mxu0
    %v1281 = vadd.f32 %v968, %v1280
    %v1282 = vpop.f32.mrf.mxu0
    %v1283 = vadd.f32 %v970, %v1282
    %1284 = vmatmul.bf16.gmra.mxu0 %v1139
    %v1285 = vpop.f32.mrf.mxu0
    %v1286 = vadd.f32 %v973, %v1285
    %v1287 = vpop.f32.mrf.mxu0
    %v1288 = vadd.f32 %v975, %v1287
    %1289 = vmatmul.bf16.gmra.mxu0 %v1141
    %v1290 = vpop.f32.mrf.mxu0
    %v1291 = vadd.f32 %v978, %v1290
    %v1292 = vpop.f32.mrf.mxu0
    %v1293 = vadd.f32 %v980, %v1292
    %1294 = vmatmul.bf16.gmra.mxu0 %v1143
    %v1295 = vpop.f32.mrf.mxu0
    %v1296 = vadd.f32 %v983, %v1295
    %v1297 = vpop.f32.mrf.mxu0
    %v1298 = vadd.f32 %v985, %v1297
    %1299 = vmatmul.bf16.gmra.mxu0 %v1145
    %v1300 = vpop.f32.mrf.mxu0
    %v1301 = vadd.f32 %v988, %v1300
    %v1302 = vpop.f32.mrf.mxu0
    %v1303 = vadd.f32 %v990, %v1302
    %1304 = vmatmul.bf16.gmra.mxu0 %v1147
    %v1305 = vpop.f32.mrf.mxu0
    %v1306 = vadd.f32 %v993, %v1305
    %v1307 = vpop.f32.mrf.mxu0
    %v1308 = vadd.f32 %v995, %v1307
    %1309 = vmatmul.bf16.gmra.mxu0 %v1149
    %v1310 = vpop.f32.mrf.mxu0
    %v1311 = vadd.f32 %v998, %v1310
    %v1312 = vpop.f32.mrf.mxu0
    %v1313 = vadd.f32 %v1000, %v1312
    %1314 = vmatmul.bf16.gmra.mxu0 %v1151
    %v1315 = vpop.f32.mrf.mxu0
    %v1316 = vadd.f32 %v1003, %v1315
    %v1317 = vpop.f32.mrf.mxu0
    %v1318 = vadd.f32 %v1005, %v1317
    %1319 = vmatmul.bf16.gmra.mxu0 %v1153
    %v1320 = vpop.f32.mrf.mxu0
    %v1321 = vadd.f32 %v1008, %v1320
    %v1322 = vpop.f32.mrf.mxu0
    %v1323 = vadd.f32 %v1010, %v1322
    %1324 = vmatmul.bf16.gmra.mxu0 %v1155
    %v1325 = vpop.f32.mrf.mxu0
    %v1326 = vadd.f32 %v1013, %v1325
    %v1327 = vpop.f32.mrf.mxu0
    %v1328 = vadd.f32 %v1015, %v1327
    %1329 = vmatmul.bf16.gmra.mxu0 %v1157
    %v1330 = vpop.f32.mrf.mxu0
    %v1331 = vadd.f32 %v1018, %v1330
    %v1332 = vpop.f32.mrf.mxu0
    %v1333 = vadd.f32 %v1020, %v1332
    %1334 = vmatmul.bf16.gmra.mxu0 %v1159
    %v1335 = vpop.f32.mrf.mxu0
    %v1336 = vadd.f32 %v1023, %v1335
    %v1337 = vpop.f32.mrf.mxu0
    %v1338 = vadd.f32 %v1025, %v1337
    %1339 = vmatmul.bf16.gmra.mxu0 %v1161
    %v1340 = vpop.f32.mrf.mxu0
    %v1341 = vadd.f32 %v1028, %v1340
    %v1342 = vpop.f32.mrf.mxu0
    %v1343 = vadd.f32 %v1030, %v1342
    %1344 = vmatmul.bf16.gmra.mxu0 %v1163
    %v1345 = vpop.f32.mrf.mxu0
    %v1346 = vadd.f32 %v1033, %v1345
    %v1347 = vpop.f32.mrf.mxu0
    %v1348 = vadd.f32 %v1035, %v1347
    %1349 = vdwg.mxu0
    %1350 = vmatpush.bf16.msra.mxu0 %v1244
    %1351 = vmatpush.bf16.msra.mxu0 %v1243
    %1352 = vmatpush.bf16.msra.mxu0 %v1242
    %1353 = vmatpush.bf16.msra.mxu0 %v1241
    %1354 = vmatpush.bf16.msra.mxu0 %v1240
    %1355 = vmatpush.bf16.msra.mxu0 %v1239
    %1356 = vmatpush.bf16.msra.mxu0 %v1238
    %1357 = vmatpush.bf16.msra.mxu0 %v1237
    %1358 = vmatmul.bf16.gmra.mxu0 %v1134
    %v1359 = vpop.f32.mrf.mxu0
    %v1360 = vadd.f32 %v1271, %v1359
    %v1361 = vpop.f32.mrf.mxu0
    %v1362 = vadd.f32 %v1273, %v1361
    %1363 = vmatmul.bf16.gmra.mxu0 %v1136
    %v1364 = vpop.f32.mrf.mxu0
    %v1365 = vadd.f32 %v1276, %v1364
    %v1366 = vpop.f32.mrf.mxu0
    %v1367 = vadd.f32 %v1278, %v1366
    %1368 = vmatmul.bf16.gmra.mxu0 %v1138
    %v1369 = vpop.f32.mrf.mxu0
    %v1370 = vadd.f32 %v1281, %v1369
    %v1371 = vpop.f32.mrf.mxu0
    %v1372 = vadd.f32 %v1283, %v1371
    %1373 = vmatmul.bf16.gmra.mxu0 %v1140
    %v1374 = vpop.f32.mrf.mxu0
    %v1375 = vadd.f32 %v1286, %v1374
    %v1376 = vpop.f32.mrf.mxu0
    %v1377 = vadd.f32 %v1288, %v1376
    %1378 = vmatmul.bf16.gmra.mxu0 %v1142
    %v1379 = vpop.f32.mrf.mxu0
    %v1380 = vadd.f32 %v1291, %v1379
    %v1381 = vpop.f32.mrf.mxu0
    %v1382 = vadd.f32 %v1293, %v1381
    %1383 = vmatmul.bf16.gmra.mxu0 %v1144
    %v1384 = vpop.f32.mrf.mxu0
    %v1385 = vadd.f32 %v1296, %v1384
    %v1386 = vpop.f32.mrf.mxu0
    %v1387 = vadd.f32 %v1298, %v1386
    %1388 = vmatmul.bf16.gmra.mxu0 %v1146
    %v1389 = vpop.f32.mrf.mxu0
    %v1390 = vadd.f32 %v1301, %v1389
    %v1391 = vpop.f32.mrf.mxu0
    %v1392 = vadd.f32 %v1303, %v1391
    %1393 = vmatmul.bf16.gmra.mxu0 %v1148
    %v1394 = vpop.f32.mrf.mxu0
    %v1395 = vadd.f32 %v1306, %v1394
    %v1396 = vpop.f32.mrf.mxu0
    %v1397 = vadd.f32 %v1308, %v1396
    %1398 = vmatmul.bf16.gmra.mxu0 %v1150
    %v1399 = vpop.f32.mrf.mxu0
    %v1400 = vadd.f32 %v1311, %v1399
    %v1401 = vpop.f32.mrf.mxu0
    %v1402 = vadd.f32 %v1313, %v1401
    %1403 = vmatmul.bf16.gmra.mxu0 %v1152
    %v1404 = vpop.f32.mrf.mxu0
    %v1405 = vadd.f32 %v1316, %v1404
    %v1406 = vpop.f32.mrf.mxu0
    %v1407 = vadd.f32 %v1318, %v1406
    %1408 = vmatmul.bf16.gmra.mxu0 %v1154
    %v1409 = vpop.f32.mrf.mxu0
    %v1410 = vadd.f32 %v1321, %v1409
    %v1411 = vpop.f32.mrf.mxu0
    %v1412 = vadd.f32 %v1323, %v1411
    %1413 = vmatmul.bf16.gmra.mxu0 %v1156
    %v1414 = vpop.f32.mrf.mxu0
    %v1415 = vadd.f32 %v1326, %v1414
    %v1416 = vpop.f32.mrf.mxu0
    %v1417 = vadd.f32 %v1328, %v1416
    %1418 = vmatmul.bf16.gmra.mxu0 %v1158
    %v1419 = vpop.f32.mrf.mxu0
    %v1420 = vadd.f32 %v1331, %v1419
    %v1421 = vpop.f32.mrf.mxu0
    %v1422 = vadd.f32 %v1333, %v1421
    %1423 = vmatmul.bf16.gmra.mxu0 %v1160
    %v1424 = vpop.f32.mrf.mxu0
    %v1425 = vadd.f32 %v1336, %v1424
    %v1426 = vpop.f32.mrf.mxu0
    %v1427 = vadd.f32 %v1338, %v1426
    %1428 = vmatmul.bf16.gmra.mxu0 %v1162
    %v1429 = vpop.f32.mrf.mxu0
    %v1430 = vadd.f32 %v1341, %v1429
    %v1431 = vpop.f32.mrf.mxu0
    %v1432 = vadd.f32 %v1343, %v1431
    %1433 = vmatmul.bf16.gmra.mxu0 %v1164
    %v1434 = vpop.f32.mrf.mxu0
    %v1435 = vadd.f32 %v1346, %v1434
    %v1436 = vpop.f32.mrf.mxu0
    %v1437 = vadd.f32 %v1348, %v1436
    %1438 = vdwg.mxu0
    %v1439 = vld [vmem:[%s3] sm:$0x1]
    %v1441 = vperm.slane %v1439, 0
    %v1443 = vadd.f32 %v1360, %v1441
    %v1444 = vadd.f32 %v1362, %v1441
    %v1445 = vadd.f32 %v1365, %v1441
    %v1446 = vadd.f32 %v1367, %v1441
    %v1447 = vadd.f32 %v1370, %v1441
    %v1448 = vadd.f32 %v1372, %v1441
    %v1449 = vadd.f32 %v1375, %v1441
    %v1450 = vadd.f32 %v1377, %v1441
    %v1451 = vadd.f32 %v1380, %v1441
    %v1452 = vadd.f32 %v1382, %v1441
    %v1453 = vadd.f32 %v1385, %v1441
    %v1454 = vadd.f32 %v1387, %v1441
    %v1455 = vadd.f32 %v1390, %v1441
    %v1456 = vadd.f32 %v1392, %v1441
    %v1457 = vadd.f32 %v1395, %v1441
    %v1458 = vadd.f32 %v1397, %v1441
    %v1459 = vadd.f32 %v1400, %v1441
    %v1460 = vadd.f32 %v1402, %v1441
    %v1461 = vadd.f32 %v1405, %v1441
    %v1462 = vadd.f32 %v1407, %v1441
    %v1463 = vadd.f32 %v1410, %v1441
    %v1464 = vadd.f32 %v1412, %v1441
    %v1465 = vadd.f32 %v1415, %v1441
    %v1466 = vadd.f32 %v1417, %v1441
    %v1467 = vadd.f32 %v1420, %v1441
    %v1468 = vadd.f32 %v1422, %v1441
    %v1469 = vadd.f32 %v1425, %v1441
    %v1470 = vadd.f32 %v1427, %v1441
    %v1471 = vadd.f32 %v1430, %v1441
    %v1472 = vadd.f32 %v1432, %v1441
    %v1473 = vadd.f32 %v1435, %v1441
    %v1474 = vadd.f32 %v1437, %v1441
    %v1475 = vmax.f32 %v1443, 0.0
    %v1476 = vmax.f32 %v1444, 0.0
    %v1477 = vmax.f32 %v1445, 0.0
    %v1478 = vmax.f32 %v1446, 0.0
    %v1479 = vmax.f32 %v1447, 0.0
    %v1480 = vmax.f32 %v1448, 0.0
    %v1481 = vmax.f32 %v1449, 0.0
    %v1482 = vmax.f32 %v1450, 0.0
    %v1483 = vmax.f32 %v1451, 0.0
    %v1484 = vmax.f32 %v1452, 0.0
    %v1485 = vmax.f32 %v1453, 0.0
    %v1486 = vmax.f32 %v1454, 0.0
    %v1487 = vmax.f32 %v1455, 0.0
    %v1488 = vmax.f32 %v1456, 0.0
    %v1489 = vmax.f32 %v1457, 0.0
    %v1490 = vmax.f32 %v1458, 0.0
    %v1491 = vmax.f32 %v1459, 0.0
    %v1492 = vmax.f32 %v1460, 0.0
    %v1493 = vmax.f32 %v1461, 0.0
    %v1494 = vmax.f32 %v1462, 0.0
    %v1495 = vmax.f32 %v1463, 0.0
    %v1496 = vmax.f32 %v1464, 0.0
    %v1497 = vmax.f32 %v1465, 0.0
    %v1498 = vmax.f32 %v1466, 0.0
    %v1499 = vmax.f32 %v1467, 0.0
    %v1500 = vmax.f32 %v1468, 0.0
    %v1501 = vmax.f32 %v1469, 0.0
    %v1502 = vmax.f32 %v1470, 0.0
    %v1503 = vmax.f32 %v1471, 0.0
    %v1504 = vmax.f32 %v1472, 0.0
    %v1505 = vmax.f32 %v1473, 0.0
    %v1506 = vmax.f32 %v1474, 0.0
    %v1507 = vpack.c.bf16 %v1476, %v1475
    %v1508 = vpack.c.bf16 %v1478, %v1477
    %v1509 = vpack.c.bf16 %v1480, %v1479
    %v1510 = vpack.c.bf16 %v1482, %v1481
    %v1511 = vpack.c.bf16 %v1484, %v1483
    %v1512 = vpack.c.bf16 %v1486, %v1485
    %v1513 = vpack.c.bf16 %v1488, %v1487
    %v1514 = vpack.c.bf16 %v1490, %v1489
    %v1515 = vpack.c.bf16 %v1492, %v1491
    %v1516 = vpack.c.bf16 %v1494, %v1493
    %v1517 = vpack.c.bf16 %v1496, %v1495
    %v1518 = vpack.c.bf16 %v1498, %v1497
    %v1519 = vpack.c.bf16 %v1500, %v1499
    %v1520 = vpack.c.bf16 %v1502, %v1501
    %v1521 = vpack.c.bf16 %v1504, %v1503
    %v1522 = vpack.c.bf16 %v1506, %v1505
    %v1523 = vld [vmem:[#allocation8] sm:$0xff]
    %v1524 = vld [vmem:[#allocation8 + $0x8] sm:$0xff]
    %v1525 = vld [vmem:[#allocation8 + $0x10] sm:$0xff]
    %v1526 = vld [vmem:[#allocation8 + $0x18] sm:$0xff]
    %v1527 = vld [vmem:[#allocation8 + $0x20] sm:$0xff]
    %v1528 = vld [vmem:[#allocation8 + $0x28] sm:$0xff]
    %v1529 = vld [vmem:[#allocation8 + $0x30] sm:$0xff]
    %v1530 = vld [vmem:[#allocation8 + $0x38] sm:$0xff]
    %v1531 = vld [vmem:[#allocation8 + $0x40] sm:$0xff]
    %v1532 = vld [vmem:[#allocation8 + $0x48] sm:$0xff]
    %v1533 = vld [vmem:[#allocation8 + $0x50] sm:$0xff]
    %v1534 = vld [vmem:[#allocation8 + $0x58] sm:$0xff]
    %v1535 = vld [vmem:[#allocation8 + $0x60] sm:$0xff]
    %v1536 = vld [vmem:[#allocation8 + $0x68] sm:$0xff]
    %v1537 = vld [vmem:[#allocation8 + $0x70] sm:$0xff]
    %v1538 = vld [vmem:[#allocation8 + $0x78] sm:$0xff]
    %v1555 = vunpack.c.l.b16 %v1523
    %v1556 = vunpack.c.h.b16 %v1523
    %v1557 = vunpack.c.l.b16 %v1524
    %v1558 = vunpack.c.h.b16 %v1524
    %v1559 = vunpack.c.l.b16 %v1525
    %v1560 = vunpack.c.h.b16 %v1525
    %v1561 = vunpack.c.l.b16 %v1526
    %v1562 = vunpack.c.h.b16 %v1526
    %v1563 = vunpack.c.l.b16 %v1527
    %v1564 = vunpack.c.h.b16 %v1527
    %v1565 = vunpack.c.l.b16 %v1528
    %v1566 = vunpack.c.h.b16 %v1528
    %v1567 = vunpack.c.l.b16 %v1529
    %v1568 = vunpack.c.h.b16 %v1529
    %v1569 = vunpack.c.l.b16 %v1530
    %v1570 = vunpack.c.h.b16 %v1530
    %v1571 = vunpack.c.l.b16 %v1531
    %v1572 = vunpack.c.h.b16 %v1531
    %v1573 = vunpack.c.l.b16 %v1532
    %v1574 = vunpack.c.h.b16 %v1532
    %v1575 = vunpack.c.l.b16 %v1533
    %v1576 = vunpack.c.h.b16 %v1533
    %v1577 = vunpack.c.l.b16 %v1534
    %v1578 = vunpack.c.h.b16 %v1534
    %v1579 = vunpack.c.l.b16 %v1535
    %v1580 = vunpack.c.h.b16 %v1535
    %v1581 = vunpack.c.l.b16 %v1536
    %v1582 = vunpack.c.h.b16 %v1536
    %v1583 = vunpack.c.l.b16 %v1537
    %v1584 = vunpack.c.h.b16 %v1537
    %v1585 = vunpack.c.l.b16 %v1538
    %v1586 = vunpack.c.h.b16 %v1538
    %v1587 = vpack.c.b16 %v1557, %v1555
    %v1588 = vpack.c.b16 %v1558, %v1556
    %v1589 = vpack.c.b16 %v1561, %v1559
    %v1590 = vpack.c.b16 %v1562, %v1560
    %v1591 = vpack.c.b16 %v1565, %v1563
    %v1592 = vpack.c.b16 %v1566, %v1564
    %v1593 = vpack.c.b16 %v1569, %v1567
    %v1594 = vpack.c.b16 %v1570, %v1568
    %v1595 = vpack.c.b16 %v1573, %v1571
    %v1596 = vpack.c.b16 %v1574, %v1572
    %v1597 = vpack.c.b16 %v1577, %v1575
    %v1598 = vpack.c.b16 %v1578, %v1576
    %v1599 = vpack.c.b16 %v1581, %v1579
    %v1600 = vpack.c.b16 %v1582, %v1580
    %v1601 = vpack.c.b16 %v1585, %v1583
    %v1602 = vpack.c.b16 %v1586, %v1584
    %1619 = vmatpush.bf16.msra.mxu0 %v1601
    %1620 = vmatpush.bf16.msra.mxu0 %v1599
    %1621 = vmatpush.bf16.msra.mxu0 %v1597
    %1622 = vmatpush.bf16.msra.mxu0 %v1595
    %1623 = vmatpush.bf16.msra.mxu0 %v1593
    %1624 = vmatpush.bf16.msra.mxu0 %v1591
    %1625 = vmatpush.bf16.msra.mxu0 %v1589
    %1626 = vmatpush.bf16.msra.mxu0 %v1587
    %1627 = vmatmul.bf16.gmra.mxu0 %v1507
    %v1628 = vpop.f32.mrf.mxu0
    %v1629 = vadd.f32 0.0, %v1628
    %v1630 = vpop.f32.mrf.mxu0
    %v1631 = vadd.f32 0.0, %v1630
    %1632 = vmatmul.bf16.gmra.mxu0 %v1508
    %v1633 = vpop.f32.mrf.mxu0
    %v1634 = vadd.f32 0.0, %v1633
    %v1635 = vpop.f32.mrf.mxu0
    %v1636 = vadd.f32 0.0, %v1635
    %1637 = vmatmul.bf16.gmra.mxu0 %v1509
    %v1638 = vpop.f32.mrf.mxu0
    %v1639 = vadd.f32 0.0, %v1638
    %v1640 = vpop.f32.mrf.mxu0
    %v1641 = vadd.f32 0.0, %v1640
    %1642 = vmatmul.bf16.gmra.mxu0 %v1510
    %v1643 = vpop.f32.mrf.mxu0
    %v1644 = vadd.f32 0.0, %v1643
    %v1645 = vpop.f32.mrf.mxu0
    %v1646 = vadd.f32 0.0, %v1645
    %1647 = vmatmul.bf16.gmra.mxu0 %v1511
    %v1648 = vpop.f32.mrf.mxu0
    %v1649 = vadd.f32 0.0, %v1648
    %v1650 = vpop.f32.mrf.mxu0
    %v1651 = vadd.f32 0.0, %v1650
    %1652 = vmatmul.bf16.gmra.mxu0 %v1512
    %v1653 = vpop.f32.mrf.mxu0
    %v1654 = vadd.f32 0.0, %v1653
    %v1655 = vpop.f32.mrf.mxu0
    %v1656 = vadd.f32 0.0, %v1655
    %1657 = vmatmul.bf16.gmra.mxu0 %v1513
    %v1658 = vpop.f32.mrf.mxu0
    %v1659 = vadd.f32 0.0, %v1658
    %v1660 = vpop.f32.mrf.mxu0
    %v1661 = vadd.f32 0.0, %v1660
    %1662 = vmatmul.bf16.gmra.mxu0 %v1514
    %v1663 = vpop.f32.mrf.mxu0
    %v1664 = vadd.f32 0.0, %v1663
    %v1665 = vpop.f32.mrf.mxu0
    %v1666 = vadd.f32 0.0, %v1665
    %1667 = vmatmul.bf16.gmra.mxu0 %v1515
    %v1668 = vpop.f32.mrf.mxu0
    %v1669 = vadd.f32 0.0, %v1668
    %v1670 = vpop.f32.mrf.mxu0
    %v1671 = vadd.f32 0.0, %v1670
    %1672 = vmatmul.bf16.gmra.mxu0 %v1516
    %v1673 = vpop.f32.mrf.mxu0
    %v1674 = vadd.f32 0.0, %v1673
    %v1675 = vpop.f32.mrf.mxu0
    %v1676 = vadd.f32 0.0, %v1675
    %1677 = vmatmul.bf16.gmra.mxu0 %v1517
    %v1678 = vpop.f32.mrf.mxu0
    %v1679 = vadd.f32 0.0, %v1678
    %v1680 = vpop.f32.mrf.mxu0
    %v1681 = vadd.f32 0.0, %v1680
    %1682 = vmatmul.bf16.gmra.mxu0 %v1518
    %v1683 = vpop.f32.mrf.mxu0
    %v1684 = vadd.f32 0.0, %v1683
    %v1685 = vpop.f32.mrf.mxu0
    %v1686 = vadd.f32 0.0, %v1685
    %1687 = vmatmul.bf16.gmra.mxu0 %v1519
    %v1688 = vpop.f32.mrf.mxu0
    %v1689 = vadd.f32 0.0, %v1688
    %v1690 = vpop.f32.mrf.mxu0
    %v1691 = vadd.f32 0.0, %v1690
    %1692 = vmatmul.bf16.gmra.mxu0 %v1520
    %v1693 = vpop.f32.mrf.mxu0
    %v1694 = vadd.f32 0.0, %v1693
    %v1695 = vpop.f32.mrf.mxu0
    %v1696 = vadd.f32 0.0, %v1695
    %1697 = vmatmul.bf16.gmra.mxu0 %v1521
    %v1698 = vpop.f32.mrf.mxu0
    %v1699 = vadd.f32 0.0, %v1698
    %v1700 = vpop.f32.mrf.mxu0
    %v1701 = vadd.f32 0.0, %v1700
    %1702 = vmatmul.bf16.gmra.mxu0 %v1522
    %v1703 = vpop.f32.mrf.mxu0
    %v1704 = vadd.f32 0.0, %v1703
    %v1705 = vpop.f32.mrf.mxu0
    %v1706 = vadd.f32 0.0, %v1705
    %1707 = vdwg.mxu0
    %1708 = vmatpush.bf16.msra.mxu0 %v1602
    %1709 = vmatpush.bf16.msra.mxu0 %v1600
    %1710 = vmatpush.bf16.msra.mxu0 %v1598
    %1711 = vmatpush.bf16.msra.mxu0 %v1596
    %1712 = vmatpush.bf16.msra.mxu0 %v1594
    %1713 = vmatpush.bf16.msra.mxu0 %v1592
    %1714 = vmatpush.bf16.msra.mxu0 %v1590
    %1715 = vmatpush.bf16.msra.mxu0 %v1588
    %1716 = vmatmul.bf16.gmra.mxu0 %v1507
    %v1717 = vpop.f32.mrf.mxu0
    %v1718 = vadd.f32 0.0, %v1717
    %v1719 = vpop.f32.mrf.mxu0
    %v1720 = vadd.f32 0.0, %v1719
    %1721 = vmatmul.bf16.gmra.mxu0 %v1508
    %v1722 = vpop.f32.mrf.mxu0
    %v1723 = vadd.f32 0.0, %v1722
    %v1724 = vpop.f32.mrf.mxu0
    %v1725 = vadd.f32 0.0, %v1724
    %1726 = vmatmul.bf16.gmra.mxu0 %v1509
    %v1727 = vpop.f32.mrf.mxu0
    %v1728 = vadd.f32 0.0, %v1727
    %v1729 = vpop.f32.mrf.mxu0
    %v1730 = vadd.f32 0.0, %v1729
    %1731 = vmatmul.bf16.gmra.mxu0 %v1510
    %v1732 = vpop.f32.mrf.mxu0
    %v1733 = vadd.f32 0.0, %v1732
    %v1734 = vpop.f32.mrf.mxu0
    %v1735 = vadd.f32 0.0, %v1734
    %1736 = vmatmul.bf16.gmra.mxu0 %v1511
    %v1737 = vpop.f32.mrf.mxu0
    %v1738 = vadd.f32 0.0, %v1737
    %v1739 = vpop.f32.mrf.mxu0
    %v1740 = vadd.f32 0.0, %v1739
    %1741 = vmatmul.bf16.gmra.mxu0 %v1512
    %v1742 = vpop.f32.mrf.mxu0
    %v1743 = vadd.f32 0.0, %v1742
    %v1744 = vpop.f32.mrf.mxu0
    %v1745 = vadd.f32 0.0, %v1744
    %1746 = vmatmul.bf16.gmra.mxu0 %v1513
    %v1747 = vpop.f32.mrf.mxu0
    %v1748 = vadd.f32 0.0, %v1747
    %v1749 = vpop.f32.mrf.mxu0
    %v1750 = vadd.f32 0.0, %v1749
    %1751 = vmatmul.bf16.gmra.mxu0 %v1514
    %v1752 = vpop.f32.mrf.mxu0
    %v1753 = vadd.f32 0.0, %v1752
    %v1754 = vpop.f32.mrf.mxu0
    %v1755 = vadd.f32 0.0, %v1754
    %1756 = vmatmul.bf16.gmra.mxu0 %v1515
    %v1757 = vpop.f32.mrf.mxu0
    %v1758 = vadd.f32 0.0, %v1757
    %v1759 = vpop.f32.mrf.mxu0
    %v1760 = vadd.f32 0.0, %v1759
    %1761 = vmatmul.bf16.gmra.mxu0 %v1516
    %v1762 = vpop.f32.mrf.mxu0
    %v1763 = vadd.f32 0.0, %v1762
    %v1764 = vpop.f32.mrf.mxu0
    %v1765 = vadd.f32 0.0, %v1764
    %1766 = vmatmul.bf16.gmra.mxu0 %v1517
    %v1767 = vpop.f32.mrf.mxu0
    %v1768 = vadd.f32 0.0, %v1767
    %v1769 = vpop.f32.mrf.mxu0
    %v1770 = vadd.f32 0.0, %v1769
    %1771 = vmatmul.bf16.gmra.mxu0 %v1518
    %v1772 = vpop.f32.mrf.mxu0
    %v1773 = vadd.f32 0.0, %v1772
    %v1774 = vpop.f32.mrf.mxu0
    %v1775 = vadd.f32 0.0, %v1774
    %1776 = vmatmul.bf16.gmra.mxu0 %v1519
    %v1777 = vpop.f32.mrf.mxu0
    %v1778 = vadd.f32 0.0, %v1777
    %v1779 = vpop.f32.mrf.mxu0
    %v1780 = vadd.f32 0.0, %v1779
    %1781 = vmatmul.bf16.gmra.mxu0 %v1520
    %v1782 = vpop.f32.mrf.mxu0
    %v1783 = vadd.f32 0.0, %v1782
    %v1784 = vpop.f32.mrf.mxu0
    %v1785 = vadd.f32 0.0, %v1784
    %1786 = vmatmul.bf16.gmra.mxu0 %v1521
    %v1787 = vpop.f32.mrf.mxu0
    %v1788 = vadd.f32 0.0, %v1787
    %v1789 = vpop.f32.mrf.mxu0
    %v1790 = vadd.f32 0.0, %v1789
    %1791 = vmatmul.bf16.gmra.mxu0 %v1522
    %v1792 = vpop.f32.mrf.mxu0
    %v1793 = vadd.f32 0.0, %v1792
    %v1794 = vpop.f32.mrf.mxu0
    %v1795 = vadd.f32 0.0, %v1794
    %1796 = vdwg.mxu0
    %v1797 = vpack.c.bf16 %v1718, %v1629
    %v1798 = vpack.c.bf16 %v1720, %v1631
    %v1799 = vpack.c.bf16 %v1723, %v1634
    %v1800 = vpack.c.bf16 %v1725, %v1636
    %v1801 = vpack.c.bf16 %v1728, %v1639
    %v1802 = vpack.c.bf16 %v1730, %v1641
    %v1803 = vpack.c.bf16 %v1733, %v1644
    %v1804 = vpack.c.bf16 %v1735, %v1646
    %v1805 = vpack.c.bf16 %v1738, %v1649
    %v1806 = vpack.c.bf16 %v1740, %v1651
    %v1807 = vpack.c.bf16 %v1743, %v1654
    %v1808 = vpack.c.bf16 %v1745, %v1656
    %v1809 = vpack.c.bf16 %v1748, %v1659
    %v1810 = vpack.c.bf16 %v1750, %v1661
    %v1811 = vpack.c.bf16 %v1753, %v1664
    %v1812 = vpack.c.bf16 %v1755, %v1666
    %v1813 = vpack.c.bf16 %v1758, %v1669
    %v1814 = vpack.c.bf16 %v1760, %v1671
    %v1815 = vpack.c.bf16 %v1763, %v1674
    %v1816 = vpack.c.bf16 %v1765, %v1676
    %v1817 = vpack.c.bf16 %v1768, %v1679
    %v1818 = vpack.c.bf16 %v1770, %v1681
    %v1819 = vpack.c.bf16 %v1773, %v1684
    %v1820 = vpack.c.bf16 %v1775, %v1686
    %v1821 = vpack.c.bf16 %v1778, %v1689
    %v1822 = vpack.c.bf16 %v1780, %v1691
    %v1823 = vpack.c.bf16 %v1783, %v1694
    %v1824 = vpack.c.bf16 %v1785, %v1696
    %v1825 = vpack.c.bf16 %v1788, %v1699
    %v1826 = vpack.c.bf16 %v1790, %v1701
    %v1827 = vpack.c.bf16 %v1793, %v1704
    %v1828 = vpack.c.bf16 %v1795, %v1706
    %v1861 = vunpack.c.h.b16 %v1797
    %v1862 = vunpack.c.h.b16 %v1798
    %v1863 = vunpack.c.h.b16 %v1799
    %v1864 = vunpack.c.h.b16 %v1800
    %v1865 = vunpack.c.h.b16 %v1801
    %v1866 = vunpack.c.h.b16 %v1802
    %v1867 = vunpack.c.h.b16 %v1803
    %v1868 = vunpack.c.h.b16 %v1804
    %v1869 = vunpack.c.h.b16 %v1805
    %v1870 = vunpack.c.h.b16 %v1806
    %v1871 = vunpack.c.h.b16 %v1807
    %v1872 = vunpack.c.h.b16 %v1808
    %v1873 = vunpack.c.h.b16 %v1809
    %v1874 = vunpack.c.h.b16 %v1810
    %v1875 = vunpack.c.h.b16 %v1811
    %v1876 = vunpack.c.h.b16 %v1812
    %v1877 = vunpack.c.h.b16 %v1813
    %v1878 = vunpack.c.h.b16 %v1814
    %v1879 = vunpack.c.h.b16 %v1815
    %v1880 = vunpack.c.h.b16 %v1816
    %v1881 = vunpack.c.h.b16 %v1817
    %v1882 = vunpack.c.h.b16 %v1818
    %v1883 = vunpack.c.h.b16 %v1819
    %v1884 = vunpack.c.h.b16 %v1820
    %v1885 = vunpack.c.h.b16 %v1821
    %v1886 = vunpack.c.h.b16 %v1822
    %v1887 = vunpack.c.h.b16 %v1823
    %v1888 = vunpack.c.h.b16 %v1824
    %v1889 = vunpack.c.h.b16 %v1825
    %v1890 = vunpack.c.h.b16 %v1826
    %v1891 = vunpack.c.h.b16 %v1827
    %v1892 = vunpack.c.h.b16 %v1828
    %v1893 = vpack.c.b16 %v1862, %v1861
    %v1894 = vpack.c.b16 %v1864, %v1863
    %v1895 = vpack.c.b16 %v1866, %v1865
    %v1896 = vpack.c.b16 %v1868, %v1867
    %v1897 = vpack.c.b16 %v1870, %v1869
    %v1898 = vpack.c.b16 %v1872, %v1871
    %v1899 = vpack.c.b16 %v1874, %v1873
    %v1900 = vpack.c.b16 %v1876, %v1875
    %v1901 = vpack.c.b16 %v1878, %v1877
    %v1902 = vpack.c.b16 %v1880, %v1879
    %v1903 = vpack.c.b16 %v1882, %v1881
    %v1904 = vpack.c.b16 %v1884, %v1883
    %v1905 = vpack.c.b16 %v1886, %v1885
    %v1906 = vpack.c.b16 %v1888, %v1887
    %v1907 = vpack.c.b16 %v1890, %v1889
    %v1908 = vpack.c.b16 %v1892, %v1891
    %1925 = vmatpush.bf16.msra.mxu0 %v1900
    %1926 = vmatpush.bf16.msra.mxu0 %v1899
    %1927 = vmatpush.bf16.msra.mxu0 %v1898
    %1928 = vmatpush.bf16.msra.mxu0 %v1897
    %1929 = vmatpush.bf16.msra.mxu0 %v1896
    %1930 = vmatpush.bf16.msra.mxu0 %v1895
    %1931 = vmatpush.bf16.msra.mxu0 %v1894
    %1932 = vmatpush.bf16.msra.mxu0 %v1893
    %1933 = vmatmul.bf16.gmra.mxu0 %v699
    %v1934 = vpop.f32.mrf.mxu0
    %v1935 = vadd.f32 0.0, %v1934
    %v1936 = vpop.f32.mrf.mxu0
    %v1937 = vadd.f32 0.0, %v1936
    %1938 = vmatmul.bf16.gmra.mxu0 %v701
    %v1939 = vpop.f32.mrf.mxu0
    %v1940 = vadd.f32 0.0, %v1939
    %v1941 = vpop.f32.mrf.mxu0
    %v1942 = vadd.f32 0.0, %v1941
    %1943 = vmatmul.bf16.gmra.mxu0 %v703
    %v1944 = vpop.f32.mrf.mxu0
    %v1945 = vadd.f32 0.0, %v1944
    %v1946 = vpop.f32.mrf.mxu0
    %v1947 = vadd.f32 0.0, %v1946
    %1948 = vmatmul.bf16.gmra.mxu0 %v705
    %v1949 = vpop.f32.mrf.mxu0
    %v1950 = vadd.f32 0.0, %v1949
    %v1951 = vpop.f32.mrf.mxu0
    %v1952 = vadd.f32 0.0, %v1951
    %1953 = vmatmul.bf16.gmra.mxu0 %v707
    %v1954 = vpop.f32.mrf.mxu0
    %v1955 = vadd.f32 0.0, %v1954
    %v1956 = vpop.f32.mrf.mxu0
    %v1957 = vadd.f32 0.0, %v1956
    %1958 = vmatmul.bf16.gmra.mxu0 %v709
    %v1959 = vpop.f32.mrf.mxu0
    %v1960 = vadd.f32 0.0, %v1959
    %v1961 = vpop.f32.mrf.mxu0
    %v1962 = vadd.f32 0.0, %v1961
    %1963 = vmatmul.bf16.gmra.mxu0 %v711
    %v1964 = vpop.f32.mrf.mxu0
    %v1965 = vadd.f32 0.0, %v1964
    %v1966 = vpop.f32.mrf.mxu0
    %v1967 = vadd.f32 0.0, %v1966
    %1968 = vmatmul.bf16.gmra.mxu0 %v713
    %v1969 = vpop.f32.mrf.mxu0
    %v1970 = vadd.f32 0.0, %v1969
    %v1971 = vpop.f32.mrf.mxu0
    %v1972 = vadd.f32 0.0, %v1971
    %1973 = vmatmul.bf16.gmra.mxu0 %v715
    %v1974 = vpop.f32.mrf.mxu0
    %v1975 = vadd.f32 0.0, %v1974
    %v1976 = vpop.f32.mrf.mxu0
    %v1977 = vadd.f32 0.0, %v1976
    %1978 = vmatmul.bf16.gmra.mxu0 %v717
    %v1979 = vpop.f32.mrf.mxu0
    %v1980 = vadd.f32 0.0, %v1979
    %v1981 = vpop.f32.mrf.mxu0
    %v1982 = vadd.f32 0.0, %v1981
    %1983 = vmatmul.bf16.gmra.mxu0 %v719
    %v1984 = vpop.f32.mrf.mxu0
    %v1985 = vadd.f32 0.0, %v1984
    %v1986 = vpop.f32.mrf.mxu0
    %v1987 = vadd.f32 0.0, %v1986
    %1988 = vmatmul.bf16.gmra.mxu0 %v721
    %v1989 = vpop.f32.mrf.mxu0
    %v1990 = vadd.f32 0.0, %v1989
    %v1991 = vpop.f32.mrf.mxu0
    %v1992 = vadd.f32 0.0, %v1991
    %1993 = vmatmul.bf16.gmra.mxu0 %v723
    %v1994 = vpop.f32.mrf.mxu0
    %v1995 = vadd.f32 0.0, %v1994
    %v1996 = vpop.f32.mrf.mxu0
    %v1997 = vadd.f32 0.0, %v1996
    %1998 = vmatmul.bf16.gmra.mxu0 %v725
    %v1999 = vpop.f32.mrf.mxu0
    %v2000 = vadd.f32 0.0, %v1999
    %v2001 = vpop.f32.mrf.mxu0
    %v2002 = vadd.f32 0.0, %v2001
    %2003 = vmatmul.bf16.gmra.mxu0 %v727
    %v2004 = vpop.f32.mrf.mxu0
    %v2005 = vadd.f32 0.0, %v2004
    %v2006 = vpop.f32.mrf.mxu0
    %v2007 = vadd.f32 0.0, %v2006
    %2008 = vmatmul.bf16.gmra.mxu0 %v729
    %v2009 = vpop.f32.mrf.mxu0
    %v2010 = vadd.f32 0.0, %v2009
    %v2011 = vpop.f32.mrf.mxu0
    %v2012 = vadd.f32 0.0, %v2011
    %2013 = vdwg.mxu0
    %2014 = vmatpush.bf16.msra.mxu0 %v1908
    %2015 = vmatpush.bf16.msra.mxu0 %v1907
    %2016 = vmatpush.bf16.msra.mxu0 %v1906
    %2017 = vmatpush.bf16.msra.mxu0 %v1905
    %2018 = vmatpush.bf16.msra.mxu0 %v1904
    %2019 = vmatpush.bf16.msra.mxu0 %v1903
    %2020 = vmatpush.bf16.msra.mxu0 %v1902
    %2021 = vmatpush.bf16.msra.mxu0 %v1901
    %2022 = vmatmul.bf16.gmra.mxu0 %v700
    %v2023 = vpop.f32.mrf.mxu0
    %v2024 = vadd.f32 %v1935, %v2023
    %v2025 = vpop.f32.mrf.mxu0
    %v2026 = vadd.f32 %v1937, %v2025
    %2027 = vmatmul.bf16.gmra.mxu0 %v702
    %v2028 = vpop.f32.mrf.mxu0
    %v2029 = vadd.f32 %v1940, %v2028
    %v2030 = vpop.f32.mrf.mxu0
    %v2031 = vadd.f32 %v1942, %v2030
    %2032 = vmatmul.bf16.gmra.mxu0 %v704
    %v2033 = vpop.f32.mrf.mxu0
    %v2034 = vadd.f32 %v1945, %v2033
    %v2035 = vpop.f32.mrf.mxu0
    %v2036 = vadd.f32 %v1947, %v2035
    %2037 = vmatmul.bf16.gmra.mxu0 %v706
    %v2038 = vpop.f32.mrf.mxu0
    %v2039 = vadd.f32 %v1950, %v2038
    %v2040 = vpop.f32.mrf.mxu0
    %v2041 = vadd.f32 %v1952, %v2040
    %2042 = vmatmul.bf16.gmra.mxu0 %v708
    %v2043 = vpop.f32.mrf.mxu0
    %v2044 = vadd.f32 %v1955, %v2043
    %v2045 = vpop.f32.mrf.mxu0
    %v2046 = vadd.f32 %v1957, %v2045
    %2047 = vmatmul.bf16.gmra.mxu0 %v710
    %v2048 = vpop.f32.mrf.mxu0
    %v2049 = vadd.f32 %v1960, %v2048
    %v2050 = vpop.f32.mrf.mxu0
    %v2051 = vadd.f32 %v1962, %v2050
    %2052 = vmatmul.bf16.gmra.mxu0 %v712
    %v2053 = vpop.f32.mrf.mxu0
    %v2054 = vadd.f32 %v1965, %v2053
    %v2055 = vpop.f32.mrf.mxu0
    %v2056 = vadd.f32 %v1967, %v2055
    %2057 = vmatmul.bf16.gmra.mxu0 %v714
    %v2058 = vpop.f32.mrf.mxu0
    %v2059 = vadd.f32 %v1970, %v2058
    %v2060 = vpop.f32.mrf.mxu0
    %v2061 = vadd.f32 %v1972, %v2060
    %2062 = vmatmul.bf16.gmra.mxu0 %v716
    %v2063 = vpop.f32.mrf.mxu0
    %v2064 = vadd.f32 %v1975, %v2063
    %v2065 = vpop.f32.mrf.mxu0
    %v2066 = vadd.f32 %v1977, %v2065
    %2067 = vmatmul.bf16.gmra.mxu0 %v718
    %v2068 = vpop.f32.mrf.mxu0
    %v2069 = vadd.f32 %v1980, %v2068
    %v2070 = vpop.f32.mrf.mxu0
    %v2071 = vadd.f32 %v1982, %v2070
    %2072 = vmatmul.bf16.gmra.mxu0 %v720
    %v2073 = vpop.f32.mrf.mxu0
    %v2074 = vadd.f32 %v1985, %v2073
    %v2075 = vpop.f32.mrf.mxu0
    %v2076 = vadd.f32 %v1987, %v2075
    %2077 = vmatmul.bf16.gmra.mxu0 %v722
    %v2078 = vpop.f32.mrf.mxu0
    %v2079 = vadd.f32 %v1990, %v2078
    %v2080 = vpop.f32.mrf.mxu0
    %v2081 = vadd.f32 %v1992, %v2080
    %2082 = vmatmul.bf16.gmra.mxu0 %v724
    %v2083 = vpop.f32.mrf.mxu0
    %v2084 = vadd.f32 %v1995, %v2083
    %v2085 = vpop.f32.mrf.mxu0
    %v2086 = vadd.f32 %v1997, %v2085
    %2087 = vmatmul.bf16.gmra.mxu0 %v726
    %v2088 = vpop.f32.mrf.mxu0
    %v2089 = vadd.f32 %v2000, %v2088
    %v2090 = vpop.f32.mrf.mxu0
    %v2091 = vadd.f32 %v2002, %v2090
    %2092 = vmatmul.bf16.gmra.mxu0 %v728
    %v2093 = vpop.f32.mrf.mxu0
    %v2094 = vadd.f32 %v2005, %v2093
    %v2095 = vpop.f32.mrf.mxu0
    %v2096 = vadd.f32 %v2007, %v2095
    %2097 = vmatmul.bf16.gmra.mxu0 %v730
    %v2098 = vpop.f32.mrf.mxu0
    %v2099 = vadd.f32 %v2010, %v2098
    %v2100 = vpop.f32.mrf.mxu0
    %v2101 = vadd.f32 %v2012, %v2100
    %2102 = vdwg.mxu0
    %v2103 = vunpack.c.l.b16 %v1797
    %v2104 = vunpack.c.l.b16 %v1798
    %v2105 = vunpack.c.l.b16 %v1799
    %v2106 = vunpack.c.l.b16 %v1800
    %v2107 = vunpack.c.l.b16 %v1801
    %v2108 = vunpack.c.l.b16 %v1802
    %v2109 = vunpack.c.l.b16 %v1803
    %v2110 = vunpack.c.l.b16 %v1804
    %v2111 = vunpack.c.l.b16 %v1805
    %v2112 = vunpack.c.l.b16 %v1806
    %v2113 = vunpack.c.l.b16 %v1807
    %v2114 = vunpack.c.l.b16 %v1808
    %v2115 = vunpack.c.l.b16 %v1809
    %v2116 = vunpack.c.l.b16 %v1810
    %v2117 = vunpack.c.l.b16 %v1811
    %v2118 = vunpack.c.l.b16 %v1812
    %v2119 = vunpack.c.l.b16 %v1813
    %v2120 = vunpack.c.l.b16 %v1814
    %v2121 = vunpack.c.l.b16 %v1815
    %v2122 = vunpack.c.l.b16 %v1816
    %v2123 = vunpack.c.l.b16 %v1817
    %v2124 = vunpack.c.l.b16 %v1818
    %v2125 = vunpack.c.l.b16 %v1819
    %v2126 = vunpack.c.l.b16 %v1820
    %v2127 = vunpack.c.l.b16 %v1821
    %v2128 = vunpack.c.l.b16 %v1822
    %v2129 = vunpack.c.l.b16 %v1823
    %v2130 = vunpack.c.l.b16 %v1824
    %v2131 = vunpack.c.l.b16 %v1825
    %v2132 = vunpack.c.l.b16 %v1826
    %v2133 = vunpack.c.l.b16 %v1827
    %v2134 = vunpack.c.l.b16 %v1828
    %v2135 = vpack.c.b16 %v2104, %v2103
    %v2136 = vpack.c.b16 %v2106, %v2105
    %v2137 = vpack.c.b16 %v2108, %v2107
    %v2138 = vpack.c.b16 %v2110, %v2109
    %v2139 = vpack.c.b16 %v2112, %v2111
    %v2140 = vpack.c.b16 %v2114, %v2113
    %v2141 = vpack.c.b16 %v2116, %v2115
    %v2142 = vpack.c.b16 %v2118, %v2117
    %v2143 = vpack.c.b16 %v2120, %v2119
    %v2144 = vpack.c.b16 %v2122, %v2121
    %v2145 = vpack.c.b16 %v2124, %v2123
    %v2146 = vpack.c.b16 %v2126, %v2125
    %v2147 = vpack.c.b16 %v2128, %v2127
    %v2148 = vpack.c.b16 %v2130, %v2129
    %v2149 = vpack.c.b16 %v2132, %v2131
    %v2150 = vpack.c.b16 %v2134, %v2133
    %2167 = vmatpush.bf16.msra.mxu0 %v2142
    %2168 = vmatpush.bf16.msra.mxu0 %v2141
    %2169 = vmatpush.bf16.msra.mxu0 %v2140
    %2170 = vmatpush.bf16.msra.mxu0 %v2139
    %2171 = vmatpush.bf16.msra.mxu0 %v2138
    %2172 = vmatpush.bf16.msra.mxu0 %v2137
    %2173 = vmatpush.bf16.msra.mxu0 %v2136
    %2174 = vmatpush.bf16.msra.mxu0 %v2135
    %2175 = vmatmul.bf16.gmra.mxu0 %v1133
    %v2176 = vpop.f32.mrf.mxu0
    %v2177 = vadd.f32 %v2024, %v2176
    %v2178 = vpop.f32.mrf.mxu0
    %v2179 = vadd.f32 %v2026, %v2178
    %2180 = vmatmul.bf16.gmra.mxu0 %v1135
    %v2181 = vpop.f32.mrf.mxu0
    %v2182 = vadd.f32 %v2029, %v2181
    %v2183 = vpop.f32.mrf.mxu0
    %v2184 = vadd.f32 %v2031, %v2183
    %2185 = vmatmul.bf16.gmra.mxu0 %v1137
    %v2186 = vpop.f32.mrf.mxu0
    %v2187 = vadd.f32 %v2034, %v2186
    %v2188 = vpop.f32.mrf.mxu0
    %v2189 = vadd.f32 %v2036, %v2188
    %2190 = vmatmul.bf16.gmra.mxu0 %v1139
    %v2191 = vpop.f32.mrf.mxu0
    %v2192 = vadd.f32 %v2039, %v2191
    %v2193 = vpop.f32.mrf.mxu0
    %v2194 = vadd.f32 %v2041, %v2193
    %2195 = vmatmul.bf16.gmra.mxu0 %v1141
    %v2196 = vpop.f32.mrf.mxu0
    %v2197 = vadd.f32 %v2044, %v2196
    %v2198 = vpop.f32.mrf.mxu0
    %v2199 = vadd.f32 %v2046, %v2198
    %2200 = vmatmul.bf16.gmra.mxu0 %v1143
    %v2201 = vpop.f32.mrf.mxu0
    %v2202 = vadd.f32 %v2049, %v2201
    %v2203 = vpop.f32.mrf.mxu0
    %v2204 = vadd.f32 %v2051, %v2203
    %2205 = vmatmul.bf16.gmra.mxu0 %v1145
    %v2206 = vpop.f32.mrf.mxu0
    %v2207 = vadd.f32 %v2054, %v2206
    %v2208 = vpop.f32.mrf.mxu0
    %v2209 = vadd.f32 %v2056, %v2208
    %2210 = vmatmul.bf16.gmra.mxu0 %v1147
    %v2211 = vpop.f32.mrf.mxu0
    %v2212 = vadd.f32 %v2059, %v2211
    %v2213 = vpop.f32.mrf.mxu0
    %v2214 = vadd.f32 %v2061, %v2213
    %2215 = vmatmul.bf16.gmra.mxu0 %v1149
    %v2216 = vpop.f32.mrf.mxu0
    %v2217 = vadd.f32 %v2064, %v2216
    %v2218 = vpop.f32.mrf.mxu0
    %v2219 = vadd.f32 %v2066, %v2218
    %2220 = vmatmul.bf16.gmra.mxu0 %v1151
    %v2221 = vpop.f32.mrf.mxu0
    %v2222 = vadd.f32 %v2069, %v2221
    %v2223 = vpop.f32.mrf.mxu0
    %v2224 = vadd.f32 %v2071, %v2223
    %2225 = vmatmul.bf16.gmra.mxu0 %v1153
    %v2226 = vpop.f32.mrf.mxu0
    %v2227 = vadd.f32 %v2074, %v2226
    %v2228 = vpop.f32.mrf.mxu0
    %v2229 = vadd.f32 %v2076, %v2228
    %2230 = vmatmul.bf16.gmra.mxu0 %v1155
    %v2231 = vpop.f32.mrf.mxu0
    %v2232 = vadd.f32 %v2079, %v2231
    %v2233 = vpop.f32.mrf.mxu0
    %v2234 = vadd.f32 %v2081, %v2233
    %2235 = vmatmul.bf16.gmra.mxu0 %v1157
    %v2236 = vpop.f32.mrf.mxu0
    %v2237 = vadd.f32 %v2084, %v2236
    %v2238 = vpop.f32.mrf.mxu0
    %v2239 = vadd.f32 %v2086, %v2238
    %2240 = vmatmul.bf16.gmra.mxu0 %v1159
    %v2241 = vpop.f32.mrf.mxu0
    %v2242 = vadd.f32 %v2089, %v2241
    %v2243 = vpop.f32.mrf.mxu0
    %v2244 = vadd.f32 %v2091, %v2243
    %2245 = vmatmul.bf16.gmra.mxu0 %v1161
    %v2246 = vpop.f32.mrf.mxu0
    %v2247 = vadd.f32 %v2094, %v2246
    %v2248 = vpop.f32.mrf.mxu0
    %v2249 = vadd.f32 %v2096, %v2248
    %2250 = vmatmul.bf16.gmra.mxu0 %v1163
    %v2251 = vpop.f32.mrf.mxu0
    %v2252 = vadd.f32 %v2099, %v2251
    %v2253 = vpop.f32.mrf.mxu0
    %v2254 = vadd.f32 %v2101, %v2253
    %2255 = vdwg.mxu0
    %2256 = vmatpush.bf16.msra.mxu0 %v2150
    %2257 = vmatpush.bf16.msra.mxu0 %v2149
    %2258 = vmatpush.bf16.msra.mxu0 %v2148
    %2259 = vmatpush.bf16.msra.mxu0 %v2147
    %2260 = vmatpush.bf16.msra.mxu0 %v2146
    %2261 = vmatpush.bf16.msra.mxu0 %v2145
    %2262 = vmatpush.bf16.msra.mxu0 %v2144
    %2263 = vmatpush.bf16.msra.mxu0 %v2143
    %2264 = vmatmul.bf16.gmra.mxu0 %v1134
    %v2265 = vpop.f32.mrf.mxu0
    %v2266 = vadd.f32 %v2177, %v2265
    %v2267 = vpop.f32.mrf.mxu0
    %v2268 = vadd.f32 %v2179, %v2267
    %2269 = vmatmul.bf16.gmra.mxu0 %v1136
    %v2270 = vpop.f32.mrf.mxu0
    %v2271 = vadd.f32 %v2182, %v2270
    %v2272 = vpop.f32.mrf.mxu0
    %v2273 = vadd.f32 %v2184, %v2272
    %2274 = vmatmul.bf16.gmra.mxu0 %v1138
    %v2275 = vpop.f32.mrf.mxu0
    %v2276 = vadd.f32 %v2187, %v2275
    %v2277 = vpop.f32.mrf.mxu0
    %v2278 = vadd.f32 %v2189, %v2277
    %2279 = vmatmul.bf16.gmra.mxu0 %v1140
    %v2280 = vpop.f32.mrf.mxu0
    %v2281 = vadd.f32 %v2192, %v2280
    %v2282 = vpop.f32.mrf.mxu0
    %v2283 = vadd.f32 %v2194, %v2282
    %2284 = vmatmul.bf16.gmra.mxu0 %v1142
    %v2285 = vpop.f32.mrf.mxu0
    %v2286 = vadd.f32 %v2197, %v2285
    %v2287 = vpop.f32.mrf.mxu0
    %v2288 = vadd.f32 %v2199, %v2287
    %2289 = vmatmul.bf16.gmra.mxu0 %v1144
    %v2290 = vpop.f32.mrf.mxu0
    %v2291 = vadd.f32 %v2202, %v2290
    %v2292 = vpop.f32.mrf.mxu0
    %v2293 = vadd.f32 %v2204, %v2292
    %2294 = vmatmul.bf16.gmra.mxu0 %v1146
    %v2295 = vpop.f32.mrf.mxu0
    %v2296 = vadd.f32 %v2207, %v2295
    %v2297 = vpop.f32.mrf.mxu0
    %v2298 = vadd.f32 %v2209, %v2297
    %2299 = vmatmul.bf16.gmra.mxu0 %v1148
    %v2300 = vpop.f32.mrf.mxu0
    %v2301 = vadd.f32 %v2212, %v2300
    %v2302 = vpop.f32.mrf.mxu0
    %v2303 = vadd.f32 %v2214, %v2302
    %2304 = vmatmul.bf16.gmra.mxu0 %v1150
    %v2305 = vpop.f32.mrf.mxu0
    %v2306 = vadd.f32 %v2217, %v2305
    %v2307 = vpop.f32.mrf.mxu0
    %v2308 = vadd.f32 %v2219, %v2307
    %2309 = vmatmul.bf16.gmra.mxu0 %v1152
    %v2310 = vpop.f32.mrf.mxu0
    %v2311 = vadd.f32 %v2222, %v2310
    %v2312 = vpop.f32.mrf.mxu0
    %v2313 = vadd.f32 %v2224, %v2312
    %2314 = vmatmul.bf16.gmra.mxu0 %v1154
    %v2315 = vpop.f32.mrf.mxu0
    %v2316 = vadd.f32 %v2227, %v2315
    %v2317 = vpop.f32.mrf.mxu0
    %v2318 = vadd.f32 %v2229, %v2317
    %2319 = vmatmul.bf16.gmra.mxu0 %v1156
    %v2320 = vpop.f32.mrf.mxu0
    %v2321 = vadd.f32 %v2232, %v2320
    %v2322 = vpop.f32.mrf.mxu0
    %v2323 = vadd.f32 %v2234, %v2322
    %2324 = vmatmul.bf16.gmra.mxu0 %v1158
    %v2325 = vpop.f32.mrf.mxu0
    %v2326 = vadd.f32 %v2237, %v2325
    %v2327 = vpop.f32.mrf.mxu0
    %v2328 = vadd.f32 %v2239, %v2327
    %2329 = vmatmul.bf16.gmra.mxu0 %v1160
    %v2330 = vpop.f32.mrf.mxu0
    %v2331 = vadd.f32 %v2242, %v2330
    %v2332 = vpop.f32.mrf.mxu0
    %v2333 = vadd.f32 %v2244, %v2332
    %2334 = vmatmul.bf16.gmra.mxu0 %v1162
    %v2335 = vpop.f32.mrf.mxu0
    %v2336 = vadd.f32 %v2247, %v2335
    %v2337 = vpop.f32.mrf.mxu0
    %v2338 = vadd.f32 %v2249, %v2337
    %2339 = vmatmul.bf16.gmra.mxu0 %v1164
    %v2340 = vpop.f32.mrf.mxu0
    %v2341 = vadd.f32 %v2252, %v2340
    %v2342 = vpop.f32.mrf.mxu0
    %v2343 = vadd.f32 %v2254, %v2342
    %2344 = vdwg.mxu0
    %v2345 = vld [vmem:[%s5] sm:$0x1]
    %v2347 = vperm.slane %v2345, 0
    %v2349 = vadd.f32 %v2266, %v2347
    %v2350 = vadd.f32 %v2268, %v2347
    %v2351 = vadd.f32 %v2271, %v2347
    %v2352 = vadd.f32 %v2273, %v2347
    %v2353 = vadd.f32 %v2276, %v2347
    %v2354 = vadd.f32 %v2278, %v2347
    %v2355 = vadd.f32 %v2281, %v2347
    %v2356 = vadd.f32 %v2283, %v2347
    %v2357 = vadd.f32 %v2286, %v2347
    %v2358 = vadd.f32 %v2288, %v2347
    %v2359 = vadd.f32 %v2291, %v2347
    %v2360 = vadd.f32 %v2293, %v2347
    %v2361 = vadd.f32 %v2296, %v2347
    %v2362 = vadd.f32 %v2298, %v2347
    %v2363 = vadd.f32 %v2301, %v2347
    %v2364 = vadd.f32 %v2303, %v2347
    %v2365 = vadd.f32 %v2306, %v2347
    %v2366 = vadd.f32 %v2308, %v2347
    %v2367 = vadd.f32 %v2311, %v2347
    %v2368 = vadd.f32 %v2313, %v2347
    %v2369 = vadd.f32 %v2316, %v2347
    %v2370 = vadd.f32 %v2318, %v2347
    %v2371 = vadd.f32 %v2321, %v2347
    %v2372 = vadd.f32 %v2323, %v2347
    %v2373 = vadd.f32 %v2326, %v2347
    %v2374 = vadd.f32 %v2328, %v2347
    %v2375 = vadd.f32 %v2331, %v2347
    %v2376 = vadd.f32 %v2333, %v2347
    %v2377 = vadd.f32 %v2336, %v2347
    %v2378 = vadd.f32 %v2338, %v2347
    %v2379 = vadd.f32 %v2341, %v2347
    %v2380 = vadd.f32 %v2343, %v2347
    %v2381 = vmax.f32 %v2349, 0.0
    %v2382 = vmax.f32 %v2350, 0.0
    %v2383 = vmax.f32 %v2351, 0.0
    %v2384 = vmax.f32 %v2352, 0.0
    %v2385 = vmax.f32 %v2353, 0.0
    %v2386 = vmax.f32 %v2354, 0.0
    %v2387 = vmax.f32 %v2355, 0.0
    %v2388 = vmax.f32 %v2356, 0.0
    %v2389 = vmax.f32 %v2357, 0.0
    %v2390 = vmax.f32 %v2358, 0.0
    %v2391 = vmax.f32 %v2359, 0.0
    %v2392 = vmax.f32 %v2360, 0.0
    %v2393 = vmax.f32 %v2361, 0.0
    %v2394 = vmax.f32 %v2362, 0.0
    %v2395 = vmax.f32 %v2363, 0.0
    %v2396 = vmax.f32 %v2364, 0.0
    %v2397 = vmax.f32 %v2365, 0.0
    %v2398 = vmax.f32 %v2366, 0.0
    %v2399 = vmax.f32 %v2367, 0.0
    %v2400 = vmax.f32 %v2368, 0.0
    %v2401 = vmax.f32 %v2369, 0.0
    %v2402 = vmax.f32 %v2370, 0.0
    %v2403 = vmax.f32 %v2371, 0.0
    %v2404 = vmax.f32 %v2372, 0.0
    %v2405 = vmax.f32 %v2373, 0.0
    %v2406 = vmax.f32 %v2374, 0.0
    %v2407 = vmax.f32 %v2375, 0.0
    %v2408 = vmax.f32 %v2376, 0.0
    %v2409 = vmax.f32 %v2377, 0.0
    %v2410 = vmax.f32 %v2378, 0.0
    %v2411 = vmax.f32 %v2379, 0.0
    %v2412 = vmax.f32 %v2380, 0.0
    %v2413 = vpack.c.bf16 %v2382, %v2381
    %v2414 = vpack.c.bf16 %v2384, %v2383
    %v2415 = vpack.c.bf16 %v2386, %v2385
    %v2416 = vpack.c.bf16 %v2388, %v2387
    %v2417 = vpack.c.bf16 %v2390, %v2389
    %v2418 = vpack.c.bf16 %v2392, %v2391
    %v2419 = vpack.c.bf16 %v2394, %v2393
    %v2420 = vpack.c.bf16 %v2396, %v2395
    %v2421 = vpack.c.bf16 %v2398, %v2397
    %v2422 = vpack.c.bf16 %v2400, %v2399
    %v2423 = vpack.c.bf16 %v2402, %v2401
    %v2424 = vpack.c.bf16 %v2404, %v2403
    %v2425 = vpack.c.bf16 %v2406, %v2405
    %v2426 = vpack.c.bf16 %v2408, %v2407
    %v2427 = vpack.c.bf16 %v2410, %v2409
    %v2428 = vpack.c.bf16 %v2412, %v2411
    %v2429 = vld [vmem:[#allocation10] sm:$0xff]
    %v2430 = vld [vmem:[#allocation10 + $0x8] sm:$0xff]
    %v2431 = vld [vmem:[#allocation10 + $0x10] sm:$0xff]
    %v2432 = vld [vmem:[#allocation10 + $0x18] sm:$0xff]
    %v2433 = vld [vmem:[#allocation10 + $0x20] sm:$0xff]
    %v2434 = vld [vmem:[#allocation10 + $0x28] sm:$0xff]
    %v2435 = vld [vmem:[#allocation10 + $0x30] sm:$0xff]
    %v2436 = vld [vmem:[#allocation10 + $0x38] sm:$0xff]
    %v2437 = vld [vmem:[#allocation10 + $0x40] sm:$0xff]
    %v2438 = vld [vmem:[#allocation10 + $0x48] sm:$0xff]
    %v2439 = vld [vmem:[#allocation10 + $0x50] sm:$0xff]
    %v2440 = vld [vmem:[#allocation10 + $0x58] sm:$0xff]
    %v2441 = vld [vmem:[#allocation10 + $0x60] sm:$0xff]
    %v2442 = vld [vmem:[#allocation10 + $0x68] sm:$0xff]
    %v2443 = vld [vmem:[#allocation10 + $0x70] sm:$0xff]
    %v2444 = vld [vmem:[#allocation10 + $0x78] sm:$0xff]
    %v2461 = vunpack.c.l.b16 %v2429
    %v2462 = vunpack.c.h.b16 %v2429
    %v2463 = vunpack.c.l.b16 %v2430
    %v2464 = vunpack.c.h.b16 %v2430
    %v2465 = vunpack.c.l.b16 %v2431
    %v2466 = vunpack.c.h.b16 %v2431
    %v2467 = vunpack.c.l.b16 %v2432
    %v2468 = vunpack.c.h.b16 %v2432
    %v2469 = vunpack.c.l.b16 %v2433
    %v2470 = vunpack.c.h.b16 %v2433
    %v2471 = vunpack.c.l.b16 %v2434
    %v2472 = vunpack.c.h.b16 %v2434
    %v2473 = vunpack.c.l.b16 %v2435
    %v2474 = vunpack.c.h.b16 %v2435
    %v2475 = vunpack.c.l.b16 %v2436
    %v2476 = vunpack.c.h.b16 %v2436
    %v2477 = vunpack.c.l.b16 %v2437
    %v2478 = vunpack.c.h.b16 %v2437
    %v2479 = vunpack.c.l.b16 %v2438
    %v2480 = vunpack.c.h.b16 %v2438
    %v2481 = vunpack.c.l.b16 %v2439
    %v2482 = vunpack.c.h.b16 %v2439
    %v2483 = vunpack.c.l.b16 %v2440
    %v2484 = vunpack.c.h.b16 %v2440
    %v2485 = vunpack.c.l.b16 %v2441
    %v2486 = vunpack.c.h.b16 %v2441
    %v2487 = vunpack.c.l.b16 %v2442
    %v2488 = vunpack.c.h.b16 %v2442
    %v2489 = vunpack.c.l.b16 %v2443
    %v2490 = vunpack.c.h.b16 %v2443
    %v2491 = vunpack.c.l.b16 %v2444
    %v2492 = vunpack.c.h.b16 %v2444
    %v2493 = vpack.c.b16 %v2463, %v2461
    %v2494 = vpack.c.b16 %v2464, %v2462
    %v2495 = vpack.c.b16 %v2467, %v2465
    %v2496 = vpack.c.b16 %v2468, %v2466
    %v2497 = vpack.c.b16 %v2471, %v2469
    %v2498 = vpack.c.b16 %v2472, %v2470
    %v2499 = vpack.c.b16 %v2475, %v2473
    %v2500 = vpack.c.b16 %v2476, %v2474
    %v2501 = vpack.c.b16 %v2479, %v2477
    %v2502 = vpack.c.b16 %v2480, %v2478
    %v2503 = vpack.c.b16 %v2483, %v2481
    %v2504 = vpack.c.b16 %v2484, %v2482
    %v2505 = vpack.c.b16 %v2487, %v2485
    %v2506 = vpack.c.b16 %v2488, %v2486
    %v2507 = vpack.c.b16 %v2491, %v2489
    %v2508 = vpack.c.b16 %v2492, %v2490
    %2525 = vmatpush.bf16.msra.mxu0 %v2507
    %2526 = vmatpush.bf16.msra.mxu0 %v2505
    %2527 = vmatpush.bf16.msra.mxu0 %v2503
    %2528 = vmatpush.bf16.msra.mxu0 %v2501
    %2529 = vmatpush.bf16.msra.mxu0 %v2499
    %2530 = vmatpush.bf16.msra.mxu0 %v2497
    %2531 = vmatpush.bf16.msra.mxu0 %v2495
    %2532 = vmatpush.bf16.msra.mxu0 %v2493
    %2533 = vmatmul.bf16.gmra.mxu0 %v2413
    %v2534 = vpop.f32.mrf.mxu0
    %v2535 = vadd.f32 0.0, %v2534
    %v2536 = vpop.f32.mrf.mxu0
    %v2537 = vadd.f32 0.0, %v2536
    %2538 = vmatmul.bf16.gmra.mxu0 %v2414
    %v2539 = vpop.f32.mrf.mxu0
    %v2540 = vadd.f32 0.0, %v2539
    %v2541 = vpop.f32.mrf.mxu0
    %v2542 = vadd.f32 0.0, %v2541
    %2543 = vmatmul.bf16.gmra.mxu0 %v2415
    %v2544 = vpop.f32.mrf.mxu0
    %v2545 = vadd.f32 0.0, %v2544
    %v2546 = vpop.f32.mrf.mxu0
    %v2547 = vadd.f32 0.0, %v2546
    %2548 = vmatmul.bf16.gmra.mxu0 %v2416
    %v2549 = vpop.f32.mrf.mxu0
    %v2550 = vadd.f32 0.0, %v2549
    %v2551 = vpop.f32.mrf.mxu0
    %v2552 = vadd.f32 0.0, %v2551
    %2553 = vmatmul.bf16.gmra.mxu0 %v2417
    %v2554 = vpop.f32.mrf.mxu0
    %v2555 = vadd.f32 0.0, %v2554
    %v2556 = vpop.f32.mrf.mxu0
    %v2557 = vadd.f32 0.0, %v2556
    %2558 = vmatmul.bf16.gmra.mxu0 %v2418
    %v2559 = vpop.f32.mrf.mxu0
    %v2560 = vadd.f32 0.0, %v2559
    %v2561 = vpop.f32.mrf.mxu0
    %v2562 = vadd.f32 0.0, %v2561
    %2563 = vmatmul.bf16.gmra.mxu0 %v2419
    %v2564 = vpop.f32.mrf.mxu0
    %v2565 = vadd.f32 0.0, %v2564
    %v2566 = vpop.f32.mrf.mxu0
    %v2567 = vadd.f32 0.0, %v2566
    %2568 = vmatmul.bf16.gmra.mxu0 %v2420
    %v2569 = vpop.f32.mrf.mxu0
    %v2570 = vadd.f32 0.0, %v2569
    %v2571 = vpop.f32.mrf.mxu0
    %v2572 = vadd.f32 0.0, %v2571
    %2573 = vmatmul.bf16.gmra.mxu0 %v2421
    %v2574 = vpop.f32.mrf.mxu0
    %v2575 = vadd.f32 0.0, %v2574
    %v2576 = vpop.f32.mrf.mxu0
    %v2577 = vadd.f32 0.0, %v2576
    %2578 = vmatmul.bf16.gmra.mxu0 %v2422
    %v2579 = vpop.f32.mrf.mxu0
    %v2580 = vadd.f32 0.0, %v2579
    %v2581 = vpop.f32.mrf.mxu0
    %v2582 = vadd.f32 0.0, %v2581
    %2583 = vmatmul.bf16.gmra.mxu0 %v2423
    %v2584 = vpop.f32.mrf.mxu0
    %v2585 = vadd.f32 0.0, %v2584
    %v2586 = vpop.f32.mrf.mxu0
    %v2587 = vadd.f32 0.0, %v2586
    %2588 = vmatmul.bf16.gmra.mxu0 %v2424
    %v2589 = vpop.f32.mrf.mxu0
    %v2590 = vadd.f32 0.0, %v2589
    %v2591 = vpop.f32.mrf.mxu0
    %v2592 = vadd.f32 0.0, %v2591
    %2593 = vmatmul.bf16.gmra.mxu0 %v2425
    %v2594 = vpop.f32.mrf.mxu0
    %v2595 = vadd.f32 0.0, %v2594
    %v2596 = vpop.f32.mrf.mxu0
    %v2597 = vadd.f32 0.0, %v2596
    %2598 = vmatmul.bf16.gmra.mxu0 %v2426
    %v2599 = vpop.f32.mrf.mxu0
    %v2600 = vadd.f32 0.0, %v2599
    %v2601 = vpop.f32.mrf.mxu0
    %v2602 = vadd.f32 0.0, %v2601
    %2603 = vmatmul.bf16.gmra.mxu0 %v2427
    %v2604 = vpop.f32.mrf.mxu0
    %v2605 = vadd.f32 0.0, %v2604
    %v2606 = vpop.f32.mrf.mxu0
    %v2607 = vadd.f32 0.0, %v2606
    %2608 = vmatmul.bf16.gmra.mxu0 %v2428
    %v2609 = vpop.f32.mrf.mxu0
    %v2610 = vadd.f32 0.0, %v2609
    %v2611 = vpop.f32.mrf.mxu0
    %v2612 = vadd.f32 0.0, %v2611
    %2613 = vdwg.mxu0
    %2614 = vmatpush.bf16.msra.mxu0 %v2508
    %2615 = vmatpush.bf16.msra.mxu0 %v2506
    %2616 = vmatpush.bf16.msra.mxu0 %v2504
    %2617 = vmatpush.bf16.msra.mxu0 %v2502
    %2618 = vmatpush.bf16.msra.mxu0 %v2500
    %2619 = vmatpush.bf16.msra.mxu0 %v2498
    %2620 = vmatpush.bf16.msra.mxu0 %v2496
    %2621 = vmatpush.bf16.msra.mxu0 %v2494
    %2622 = vmatmul.bf16.gmra.mxu0 %v2413
    %v2623 = vpop.f32.mrf.mxu0
    %v2624 = vadd.f32 0.0, %v2623
    %v2625 = vpop.f32.mrf.mxu0
    %v2626 = vadd.f32 0.0, %v2625
    %2627 = vmatmul.bf16.gmra.mxu0 %v2414
    %v2628 = vpop.f32.mrf.mxu0
    %v2629 = vadd.f32 0.0, %v2628
    %v2630 = vpop.f32.mrf.mxu0
    %v2631 = vadd.f32 0.0, %v2630
    %2632 = vmatmul.bf16.gmra.mxu0 %v2415
    %v2633 = vpop.f32.mrf.mxu0
    %v2634 = vadd.f32 0.0, %v2633
    %v2635 = vpop.f32.mrf.mxu0
    %v2636 = vadd.f32 0.0, %v2635
    %2637 = vmatmul.bf16.gmra.mxu0 %v2416
    %v2638 = vpop.f32.mrf.mxu0
    %v2639 = vadd.f32 0.0, %v2638
    %v2640 = vpop.f32.mrf.mxu0
    %v2641 = vadd.f32 0.0, %v2640
    %2642 = vmatmul.bf16.gmra.mxu0 %v2417
    %v2643 = vpop.f32.mrf.mxu0
    %v2644 = vadd.f32 0.0, %v2643
    %v2645 = vpop.f32.mrf.mxu0
    %v2646 = vadd.f32 0.0, %v2645
    %2647 = vmatmul.bf16.gmra.mxu0 %v2418
    %v2648 = vpop.f32.mrf.mxu0
    %v2649 = vadd.f32 0.0, %v2648
    %v2650 = vpop.f32.mrf.mxu0
    %v2651 = vadd.f32 0.0, %v2650
    %2652 = vmatmul.bf16.gmra.mxu0 %v2419
    %v2653 = vpop.f32.mrf.mxu0
    %v2654 = vadd.f32 0.0, %v2653
    %v2655 = vpop.f32.mrf.mxu0
    %v2656 = vadd.f32 0.0, %v2655
    %2657 = vmatmul.bf16.gmra.mxu0 %v2420
    %v2658 = vpop.f32.mrf.mxu0
    %v2659 = vadd.f32 0.0, %v2658
    %v2660 = vpop.f32.mrf.mxu0
    %v2661 = vadd.f32 0.0, %v2660
    %2662 = vmatmul.bf16.gmra.mxu0 %v2421
    %v2663 = vpop.f32.mrf.mxu0
    %v2664 = vadd.f32 0.0, %v2663
    %v2665 = vpop.f32.mrf.mxu0
    %v2666 = vadd.f32 0.0, %v2665
    %2667 = vmatmul.bf16.gmra.mxu0 %v2422
    %v2668 = vpop.f32.mrf.mxu0
    %v2669 = vadd.f32 0.0, %v2668
    %v2670 = vpop.f32.mrf.mxu0
    %v2671 = vadd.f32 0.0, %v2670
    %2672 = vmatmul.bf16.gmra.mxu0 %v2423
    %v2673 = vpop.f32.mrf.mxu0
    %v2674 = vadd.f32 0.0, %v2673
    %v2675 = vpop.f32.mrf.mxu0
    %v2676 = vadd.f32 0.0, %v2675
    %2677 = vmatmul.bf16.gmra.mxu0 %v2424
    %v2678 = vpop.f32.mrf.mxu0
    %v2679 = vadd.f32 0.0, %v2678
    %v2680 = vpop.f32.mrf.mxu0
    %v2681 = vadd.f32 0.0, %v2680
    %2682 = vmatmul.bf16.gmra.mxu0 %v2425
    %v2683 = vpop.f32.mrf.mxu0
    %v2684 = vadd.f32 0.0, %v2683
    %v2685 = vpop.f32.mrf.mxu0
    %v2686 = vadd.f32 0.0, %v2685
    %2687 = vmatmul.bf16.gmra.mxu0 %v2426
    %v2688 = vpop.f32.mrf.mxu0
    %v2689 = vadd.f32 0.0, %v2688
    %v2690 = vpop.f32.mrf.mxu0
    %v2691 = vadd.f32 0.0, %v2690
    %2692 = vmatmul.bf16.gmra.mxu0 %v2427
    %v2693 = vpop.f32.mrf.mxu0
    %v2694 = vadd.f32 0.0, %v2693
    %v2695 = vpop.f32.mrf.mxu0
    %v2696 = vadd.f32 0.0, %v2695
    %2697 = vmatmul.bf16.gmra.mxu0 %v2428
    %v2698 = vpop.f32.mrf.mxu0
    %v2699 = vadd.f32 0.0, %v2698
    %v2700 = vpop.f32.mrf.mxu0
    %v2701 = vadd.f32 0.0, %v2700
    %2702 = vdwg.mxu0
    %v2703 = vpack.c.bf16 %v2624, %v2535
    %v2704 = vpack.c.bf16 %v2626, %v2537
    %v2705 = vpack.c.bf16 %v2629, %v2540
    %v2706 = vpack.c.bf16 %v2631, %v2542
    %v2707 = vpack.c.bf16 %v2634, %v2545
    %v2708 = vpack.c.bf16 %v2636, %v2547
    %v2709 = vpack.c.bf16 %v2639, %v2550
    %v2710 = vpack.c.bf16 %v2641, %v2552
    %v2711 = vpack.c.bf16 %v2644, %v2555
    %v2712 = vpack.c.bf16 %v2646, %v2557
    %v2713 = vpack.c.bf16 %v2649, %v2560
    %v2714 = vpack.c.bf16 %v2651, %v2562
    %v2715 = vpack.c.bf16 %v2654, %v2565
    %v2716 = vpack.c.bf16 %v2656, %v2567
    %v2717 = vpack.c.bf16 %v2659, %v2570
    %v2718 = vpack.c.bf16 %v2661, %v2572
    %v2719 = vpack.c.bf16 %v2664, %v2575
    %v2720 = vpack.c.bf16 %v2666, %v2577
    %v2721 = vpack.c.bf16 %v2669, %v2580
    %v2722 = vpack.c.bf16 %v2671, %v2582
    %v2723 = vpack.c.bf16 %v2674, %v2585
    %v2724 = vpack.c.bf16 %v2676, %v2587
    %v2725 = vpack.c.bf16 %v2679, %v2590
    %v2726 = vpack.c.bf16 %v2681, %v2592
    %v2727 = vpack.c.bf16 %v2684, %v2595
    %v2728 = vpack.c.bf16 %v2686, %v2597
    %v2729 = vpack.c.bf16 %v2689, %v2600
    %v2730 = vpack.c.bf16 %v2691, %v2602
    %v2731 = vpack.c.bf16 %v2694, %v2605
    %v2732 = vpack.c.bf16 %v2696, %v2607
    %v2733 = vpack.c.bf16 %v2699, %v2610
    %v2734 = vpack.c.bf16 %v2701, %v2612
    %2735 = vst [vmem:[#allocation11] sm:$0xf] %v2703
    %2736 = vst [vmem:[#allocation11 + $0x4] sm:$0xf] %v2704
    %2737 = vst [vmem:[#allocation11 + $0x8] sm:$0xf] %v2705
    %2738 = vst [vmem:[#allocation11 + $0xc] sm:$0xf] %v2706
    %2739 = vst [vmem:[#allocation11 + $0x10] sm:$0xf] %v2707
    %2740 = vst [vmem:[#allocation11 + $0x14] sm:$0xf] %v2708
    %2741 = vst [vmem:[#allocation11 + $0x18] sm:$0xf] %v2709
    %2742 = vst [vmem:[#allocation11 + $0x1c] sm:$0xf] %v2710
    %2743 = vst [vmem:[#allocation11 + $0x20] sm:$0xf] %v2711
    %2744 = vst [vmem:[#allocation11 + $0x24] sm:$0xf] %v2712
    %2745 = vst [vmem:[#allocation11 + $0x28] sm:$0xf] %v2713
    %2746 = vst [vmem:[#allocation11 + $0x2c] sm:$0xf] %v2714
    %2747 = vst [vmem:[#allocation11 + $0x30] sm:$0xf] %v2715
    %2748 = vst [vmem:[#allocation11 + $0x34] sm:$0xf] %v2716
    %2749 = vst [vmem:[#allocation11 + $0x38] sm:$0xf] %v2717
    %2750 = vst [vmem:[#allocation11 + $0x3c] sm:$0xf] %v2718
    %2751 = vst [vmem:[#allocation11 + $0x40] sm:$0xf] %v2719
    %2752 = vst [vmem:[#allocation11 + $0x44] sm:$0xf] %v2720
    %2753 = vst [vmem:[#allocation11 + $0x48] sm:$0xf] %v2721
    %2754 = vst [vmem:[#allocation11 + $0x4c] sm:$0xf] %v2722
    %2755 = vst [vmem:[#allocation11 + $0x50] sm:$0xf] %v2723
    %2756 = vst [vmem:[#allocation11 + $0x54] sm:$0xf] %v2724
    %2757 = vst [vmem:[#allocation11 + $0x58] sm:$0xf] %v2725
    %2758 = vst [vmem:[#allocation11 + $0x5c] sm:$0xf] %v2726
    %2759 = vst [vmem:[#allocation11 + $0x60] sm:$0xf] %v2727
    %2760 = vst [vmem:[#allocation11 + $0x64] sm:$0xf] %v2728
    %2761 = vst [vmem:[#allocation11 + $0x68] sm:$0xf] %v2729
    %2762 = vst [vmem:[#allocation11 + $0x6c] sm:$0xf] %v2730
    %2763 = vst [vmem:[#allocation11 + $0x70] sm:$0xf] %v2731
    %2764 = vst [vmem:[#allocation11 + $0x74] sm:$0xf] %v2732
    %2765 = vst [vmem:[#allocation11 + $0x78] sm:$0xf] %v2733
    %2766 = vst [vmem:[#allocation11 + $0x7c] sm:$0xf] %v2734
    %v2799 = vrot.slane %v2703, 4
    %v2800 = vrot.slane %v2704, 4
    %v2801 = vrot.slane %v2705, 4
    %v2802 = vrot.slane %v2706, 4
    %v2803 = vrot.slane %v2707, 4
    %v2804 = vrot.slane %v2708, 4
    %v2805 = vrot.slane %v2709, 4
    %v2806 = vrot.slane %v2710, 4
    %v2807 = vrot.slane %v2711, 4
    %v2808 = vrot.slane %v2712, 4
    %v2809 = vrot.slane %v2713, 4
    %v2810 = vrot.slane %v2714, 4
    %v2811 = vrot.slane %v2715, 4
    %v2812 = vrot.slane %v2716, 4
    %v2813 = vrot.slane %v2717, 4
    %v2814 = vrot.slane %v2718, 4
    %v2815 = vrot.slane %v2719, 4
    %v2816 = vrot.slane %v2720, 4
    %v2817 = vrot.slane %v2721, 4
    %v2818 = vrot.slane %v2722, 4
    %v2819 = vrot.slane %v2723, 4
    %v2820 = vrot.slane %v2724, 4
    %v2821 = vrot.slane %v2725, 4
    %v2822 = vrot.slane %v2726, 4
    %v2823 = vrot.slane %v2727, 4
    %v2824 = vrot.slane %v2728, 4
    %v2825 = vrot.slane %v2729, 4
    %v2826 = vrot.slane %v2730, 4
    %v2827 = vrot.slane %v2731, 4
    %v2828 = vrot.slane %v2732, 4
    %v2829 = vrot.slane %v2733, 4
    %v2830 = vrot.slane %v2734, 4
    %2863 = vst [vmem:[#allocation11 + $0x80] sm:$0xf] %v2799
    %2864 = vst [vmem:[#allocation11 + $0x84] sm:$0xf] %v2800
    %2865 = vst [vmem:[#allocation11 + $0x88] sm:$0xf] %v2801
    %2866 = vst [vmem:[#allocation11 + $0x8c] sm:$0xf] %v2802
    %2867 = vst [vmem:[#allocation11 + $0x90] sm:$0xf] %v2803
    %2868 = vst [vmem:[#allocation11 + $0x94] sm:$0xf] %v2804
    %2869 = vst [vmem:[#allocation11 + $0x98] sm:$0xf] %v2805
    %2870 = vst [vmem:[#allocation11 + $0x9c] sm:$0xf] %v2806
    %2871 = vst [vmem:[#allocation11 + $0xa0] sm:$0xf] %v2807
    %2872 = vst [vmem:[#allocation11 + $0xa4] sm:$0xf] %v2808
    %2873 = vst [vmem:[#allocation11 + $0xa8] sm:$0xf] %v2809
    %2874 = vst [vmem:[#allocation11 + $0xac] sm:$0xf] %v2810
    %2875 = vst [vmem:[#allocation11 + $0xb0] sm:$0xf] %v2811
    %2876 = vst [vmem:[#allocation11 + $0xb4] sm:$0xf] %v2812
    %2877 = vst [vmem:[#allocation11 + $0xb8] sm:$0xf] %v2813
    %2878 = vst [vmem:[#allocation11 + $0xbc] sm:$0xf] %v2814
    %2879 = vst [vmem:[#allocation11 + $0xc0] sm:$0xf] %v2815
    %2880 = vst [vmem:[#allocation11 + $0xc4] sm:$0xf] %v2816
    %2881 = vst [vmem:[#allocation11 + $0xc8] sm:$0xf] %v2817
    %2882 = vst [vmem:[#allocation11 + $0xcc] sm:$0xf] %v2818
    %2883 = vst [vmem:[#allocation11 + $0xd0] sm:$0xf] %v2819
    %2884 = vst [vmem:[#allocation11 + $0xd4] sm:$0xf] %v2820
    %2885 = vst [vmem:[#allocation11 + $0xd8] sm:$0xf] %v2821
    %2886 = vst [vmem:[#allocation11 + $0xdc] sm:$0xf] %v2822
    %2887 = vst [vmem:[#allocation11 + $0xe0] sm:$0xf] %v2823
    %2888 = vst [vmem:[#allocation11 + $0xe4] sm:$0xf] %v2824
    %2889 = vst [vmem:[#allocation11 + $0xe8] sm:$0xf] %v2825
    %2890 = vst [vmem:[#allocation11 + $0xec] sm:$0xf] %v2826
    %2891 = vst [vmem:[#allocation11 + $0xf0] sm:$0xf] %v2827
    %2892 = vst [vmem:[#allocation11 + $0xf4] sm:$0xf] %v2828
    %2893 = vst [vmem:[#allocation11 + $0xf8] sm:$0xf] %v2829
    %2894 = vst [vmem:[#allocation11 + $0xfc] sm:$0xf] %v2830
    // Predicated region
    $region50: #{tpu_custom_call.1} parent=1 // pred_check
      _
    $region51: #{tpu_custom_call.1} parent=1 // pred_check_branch
      %2896 = sbr.rel (0) target = $region53
    $region52: #{tpu_custom_call.1} parent=1 // pred_region
      %2898 = vsyncadd [#allocation4], 0
      %s2899 = sshll.u32 [#allocation11], 4
      %s2900 = int_to_ptr.vmem [resolvable:$true] %s2899
      %s2901 = sshll.u32 %s7, 4
      %s2902 = int_to_ptr.hbm [resolvable:$true] %s2901
      %2907 = dma.vmem_to_hbm [thread:$0]  %s2900, 4096, %s2902, [#allocation4], 64, 64, 4
    $region53: #{tpu_custom_call.1} parent=1 // pred_fallthru
      _
    // Predicated region
    $region54: #{tpu_custom_call.1} parent=1 // pred_check
      _
    $region55: #{tpu_custom_call.1} parent=1 // pred_check_branch
      %2909 = sbr.rel (0) target = $region57
    $region56: #{tpu_custom_call.1} parent=1 // pred_region
      %2911 = dma.done [#allocation4], 4096
    $region57: #{tpu_custom_call.1} parent=1 // pred_fallthru
      _
    %2912 = vsyncpa [#allocation3], 1
    %2913 = vsyncpa [#allocation6], 1
    %2914 = vsyncpa [#allocation9], 1
    %2915 = vsyncpa [#allocation4], 1

</llo_original>
